<compile_context>
chip_gen: v7x
topology: tpu7x:2x2x1
jax: 0.10.0
libtpu: 0.0.40
codegen_flags: <defaults>
</compile_context>

<pallas_src>
import jax
import jax.numpy as jnp
from jax.experimental import pallas as pl
from jax.experimental.pallas import tpu as pltpu

HIDDEN = 768         # BERT hidden size (VisualBert pooler_output dim)
INTERM = 64          # interm_size default
NUM_CLASSES = 2      # multitask=False branch -> Linear(interm, 2)
INTERM_PAD = 128     # lane-padded intermediate width
OUT_PAD = 128        # lane-padded classifier width (logits live in cols [0, 2))
LEAKY_SLOPE = 0.01   # torch.nn.LeakyReLU default negative_slope


def visualbert_head_kernel(cls_ref, wpq_ref, sp_ref, bp_ref,
                           w1q_ref, s1_ref, b1_ref, w2_ref, b2_ref, out_ref):
    # cls_ref: (TB, HIDDEN) bf16 CLS-token hidden states.
    cls = cls_ref[...]

    # VisualBert pooler: dense + tanh. int8 weights are widened to bf16 for the
    # MXU; the per-output-channel dequant scale is applied after the f32
    # accumulation (cheap [TB, 768] multiply instead of a [768, 768] one).
    wp = wpq_ref[...].astype(jnp.bfloat16)
    pooled = jnp.tanh(
        jnp.dot(cls, wp, preferred_element_type=jnp.float32) * sp_ref[...]
        + bp_ref[...])

    # self.intermediate: Linear(768 -> 64, lane-padded to 128) + LeakyReLU.
    w1 = w1q_ref[...].astype(jnp.bfloat16)
    y = (jnp.dot(pooled.astype(jnp.bfloat16), w1,
                 preferred_element_type=jnp.float32) * s1_ref[...]
         + b1_ref[...])
    y = jnp.maximum(y, LEAKY_SLOPE * y)          # LeakyReLU, single VPU max

    # self.classifier: Linear(64 -> 2), zero-padded to a 128x128 bf16 weight so
    # the output store is a full-lane (unmasked) vst; real logits sit in cols 0..1.
    out_ref[...] = (jnp.dot(y.astype(jnp.bfloat16), w2_ref[...],
                            preferred_element_type=jnp.float32)
                    + b2_ref[...]).astype(out_ref.dtype)


def visualbert_head(sequence_output, kparams):
    """sequence_output: [B, S, HIDDEN] encoder output (synthetic stand-in for
    the VisualBert transformer's last hidden state, any float dtype).
    Returns [B, NUM_CLASSES] f32 logits."""
    B, S, H = sequence_output.shape
    assert H == HIDDEN

    # CLS slice + bf16 cast in the wrapper -> clean lane-dense (B, 768) bf16
    # tile for the kernel (avoids a 1-row window on a packed second-minor dim).
    cls = sequence_output[:, 0, :].astype(jnp.bfloat16)

    # Batch tiling: single block up to 256 rows; 256-row "parallel" blocks when
    # B is large so the grid can shard across both v7x TensorCores while still
    # amortizing the ~0.35 us per-grid-step overhead.
    if B <= 256:
        B_pad = max(16, ((B + 15) // 16) * 16)
        TB = B_pad
    else:
        TB = 256
        B_pad = ((B + TB - 1) // TB) * TB
    if B_pad != B:
        cls = jnp.pad(cls, ((0, B_pad - B), (0, 0)))
    grid = (B_pad // TB,)

    wpq, sp, bp = kparams["wpq"], kparams["sp"], kparams["bp"]
    w1q, s1, b1 = kparams["w1q"], kparams["s1"], kparams["b1"]
    w2, b2 = kparams["w2"], kparams["b2"]

    flops = 2 * B_pad * (HIDDEN * HIDDEN + HIDDEN * INTERM_PAD
                         + INTERM_PAD * OUT_PAD)
    weight_bytes = (HIDDEN * HIDDEN                      # wpq  int8
                    + HIDDEN * INTERM_PAD                # w1q  int8
                    + 2 * INTERM_PAD * OUT_PAD           # w2   bf16
                    + 4 * (2 * HIDDEN + 2 * INTERM_PAD + OUT_PAD))  # scales+biases
    cost = pl.CostEstimate(
        flops=flops,
        transcendentals=B_pad * HIDDEN,                  # tanh
        bytes_accessed=(weight_bytes
                        + 2 * B_pad * HIDDEN             # bf16 CLS rows in
                        + 4 * B_pad * OUT_PAD))          # f32 logits out

    shared = lambda shape: pl.BlockSpec(shape, lambda i: (0,) * len(shape))

    out = pl.pallas_call(
        visualbert_head_kernel,
        out_shape=jax.ShapeDtypeStruct((B_pad, OUT_PAD), jnp.float32),
        grid=grid,
        in_specs=[
            pl.BlockSpec((TB, HIDDEN), lambda i: (i, 0)),   # CLS rows (bf16)
            shared((HIDDEN, HIDDEN)),        # wpq (int8)
            shared((1, HIDDEN)),             # sp  (f32 per-col dequant scale)
            shared((1, HIDDEN)),             # bp  (f32)
            shared((HIDDEN, INTERM_PAD)),    # w1q (int8, lane-padded)
            shared((1, INTERM_PAD)),         # s1  (f32, lane-padded)
            shared((1, INTERM_PAD)),         # b1  (f32, lane-padded)
            shared((INTERM_PAD, OUT_PAD)),   # w2  (bf16, zero-padded)
            shared((1, OUT_PAD)),            # b2  (f32, zero-padded)
        ],
        out_specs=pl.BlockSpec((TB, OUT_PAD), lambda i: (i, 0)),
        compiler_params=pltpu.CompilerParams(
            dimension_semantics=("parallel",)),
        cost_estimate=cost,
    )(cls, wpq, sp, bp, w1q, s1, b1, w2, b2)
    return out[:B, :NUM_CLASSES]


def init_params(key):
    """Logical (PyTorch-equivalent, transposed-to-[in,out]) f32 parameters."""
    k = jax.random.split(key, 6)
    scale = 0.02
    return {
        "wp": scale * jax.random.normal(k[0], (HIDDEN, HIDDEN), jnp.float32),
        "bp": scale * jax.random.normal(k[1], (1, HIDDEN), jnp.float32),
        "w1": scale * jax.random.normal(k[2], (HIDDEN, INTERM), jnp.float32),
        "b1": scale * jax.random.normal(k[3], (1, INTERM), jnp.float32),
        "w2": scale * jax.random.normal(k[4], (INTERM, NUM_CLASSES), jnp.float32),
        "b2": scale * jax.random.normal(k[5], (1, NUM_CLASSES), jnp.float32),
    }


def _quantize_per_out_channel(w):
    """Symmetric int8 per-output-channel quantization: w ~= q * scale."""
    amax = jnp.max(jnp.abs(w), axis=0, keepdims=True)
    scale = jnp.where(amax > 0, amax, 1.0) / 127.0
    q = jnp.clip(jnp.round(w / scale), -127, 127).astype(jnp.int8)
    return q, scale.astype(jnp.float32)


def prepare_kernel_params(params):
    """One-time packing: wp/w1 -> int8 + per-column f32 scale, narrow layers
    zero-padded to 128 lanes, w2 -> bf16, biases stay f32."""
    wpq, sp = _quantize_per_out_channel(params["wp"])

    w1_pad = jnp.zeros((HIDDEN, INTERM_PAD), jnp.float32)
    w1_pad = w1_pad.at[:, :INTERM].set(params["w1"])
    w1q, s1 = _quantize_per_out_channel(w1_pad)
    b1 = jnp.zeros((1, INTERM_PAD), jnp.float32).at[:, :INTERM].set(params["b1"])

    w2 = jnp.zeros((INTERM_PAD, OUT_PAD), jnp.bfloat16)
    w2 = w2.at[:INTERM, :NUM_CLASSES].set(params["w2"].astype(jnp.bfloat16))
    b2 = jnp.zeros((1, OUT_PAD), jnp.float32).at[:, :NUM_CLASSES].set(params["b2"])

    return {"wpq": wpq, "sp": sp, "bp": params["bp"],
            "w1q": w1q, "s1": s1, "b1": b1, "w2": w2, "b2": b2}


def reference(sequence_output, kparams):
    """Pure-JAX reference using the identical quantized weights / bf16 operands
    / f32 accumulation as the kernel."""
    cls = sequence_output[:, 0, :].astype(jnp.bfloat16)
    wp = kparams["wpq"].astype(jnp.bfloat16)
    pooled = jnp.tanh(
        jnp.dot(cls, wp, preferred_element_type=jnp.float32) * kparams["sp"]
        + kparams["bp"])
    w1 = kparams["w1q"].astype(jnp.bfloat16)
    y = (jnp.dot(pooled.astype(jnp.bfloat16), w1,
                 preferred_element_type=jnp.float32) * kparams["s1"]
         + kparams["b1"])
    y = jnp.maximum(y, LEAKY_SLOPE * y)
    logits = jnp.dot(y.astype(jnp.bfloat16), kparams["w2"],
                     preferred_element_type=jnp.float32) + kparams["b2"]
    return logits[:, :NUM_CLASSES]


if __name__ == "__main__":
    key = jax.random.PRNGKey(0)
    kp, kx = jax.random.split(key)
    params = init_params(kp)
    kernel_params = prepare_kernel_params(params)

    B, S = 8, 16  # small batch, short (text + visual-token) sequence
    # Synthetic stand-in for the VisualBert encoder last hidden state (bf16,
    # as a real encoder kernel would emit).
    sequence_output = jax.random.normal(
        kx, (B, S, HIDDEN), jnp.float32).astype(jnp.bfloat16)

    logits = visualbert_head(sequence_output, kernel_params)
    jax.block_until_ready(logits)

    ref = reference(sequence_output, kernel_params)
    assert logits.shape == (B, NUM_CLASSES)
    max_err = float(jnp.max(jnp.abs(logits - ref)))
    assert jnp.allclose(logits, ref, atol=2e-3, rtol=2e-3), max_err
    print("KERNEL_OK")
</pallas_src>

<mosaic_0001>
module attributes {stable_mosaic.version = 11 : i64} {
  func.func @visualbert_head_kernel(%arg0: i32, %arg1: memref<16x768xbf16, #tpu.memory_space<vmem>>, %arg2: memref<768x768xi8, #tpu.memory_space<vmem>>, %arg3: memref<1x768xf32, #tpu.memory_space<vmem>>, %arg4: memref<1x768xf32, #tpu.memory_space<vmem>>, %arg5: memref<768x128xi8, #tpu.memory_space<vmem>>, %arg6: memref<1x128xf32, #tpu.memory_space<vmem>>, %arg7: memref<1x128xf32, #tpu.memory_space<vmem>>, %arg8: memref<128x128xbf16, #tpu.memory_space<vmem>>, %arg9: memref<1x128xf32, #tpu.memory_space<vmem>>, %arg10: memref<16x128xf32, #tpu.memory_space<vmem>>) attributes {dimension_semantics = [#tpu.dimension_semantics<parallel>], iteration_bounds = array<i64: 1>, scalar_prefetch = 0 : i64, scratch_operands = 0 : i64, tpu.core_type = #tpu.core_type<tc>, window_params = [{transform_indices = @transform_0, window_bounds = array<i64: 16, 768>}, {pipeline_mode = #tpu.pipeline_mode<synchronous>, transform_indices = @transform_1, window_bounds = array<i64: 768, 768>}, {pipeline_mode = #tpu.pipeline_mode<synchronous>, transform_indices = @transform_2, window_bounds = array<i64: 1, 768>}, {pipeline_mode = #tpu.pipeline_mode<synchronous>, transform_indices = @transform_3, window_bounds = array<i64: 1, 768>}, {pipeline_mode = #tpu.pipeline_mode<synchronous>, transform_indices = @transform_4, window_bounds = array<i64: 768, 128>}, {pipeline_mode = #tpu.pipeline_mode<synchronous>, transform_indices = @transform_5, window_bounds = array<i64: 1, 128>}, {pipeline_mode = #tpu.pipeline_mode<synchronous>, transform_indices = @transform_6, window_bounds = array<i64: 1, 128>}, {pipeline_mode = #tpu.pipeline_mode<synchronous>, transform_indices = @transform_7, window_bounds = array<i64: 128, 128>}, {pipeline_mode = #tpu.pipeline_mode<synchronous>, transform_indices = @transform_8, window_bounds = array<i64: 1, 128>}, {transform_indices = @transform_9, window_bounds = array<i64: 16, 128>}]} {
    %c0 = arith.constant 0 : index
    %c0_0 = arith.constant 0 : index
    %0 = vector.load %arg1[%c0, %c0_0] : memref<16x768xbf16, #tpu.memory_space<vmem>>, vector<16x768xbf16>
    %c0_1 = arith.constant 0 : index
    %c0_2 = arith.constant 0 : index
    %1 = vector.load %arg2[%c0_1, %c0_2] : memref<768x768xi8, #tpu.memory_space<vmem>>, vector<768x768xi8>
    %2 = arith.sitofp %1 : vector<768x768xi8> to vector<768x768xbf16>
    %cst = arith.constant dense<0.000000e+00> : vector<16x768xf32>
    %3 = tpu.matmul %0, %2, %cst {dimension_numbers = #tpu.dot_dimension_numbers<[1], [0], [0], [1], [0, 0, 1, 1], [], []>} : vector<16x768xbf16>, vector<768x768xbf16>, vector<16x768xf32> -> vector<16x768xf32>
    %c0_3 = arith.constant 0 : index
    %c0_4 = arith.constant 0 : index
    %4 = vector.load %arg3[%c0_3, %c0_4] : memref<1x768xf32, #tpu.memory_space<vmem>>, vector<1x768xf32>
    %5 = vector.broadcast %4 : vector<1x768xf32> to vector<16x768xf32>
    %6 = arith.mulf %3, %5 : vector<16x768xf32>
    %c0_5 = arith.constant 0 : index
    %c0_6 = arith.constant 0 : index
    %7 = vector.load %arg4[%c0_5, %c0_6] : memref<1x768xf32, #tpu.memory_space<vmem>>, vector<1x768xf32>
    %8 = vector.broadcast %7 : vector<1x768xf32> to vector<16x768xf32>
    %9 = arith.addf %6, %8 : vector<16x768xf32>
    %10 = math.tanh %9 : vector<16x768xf32>
    %c0_7 = arith.constant 0 : index
    %c0_8 = arith.constant 0 : index
    %11 = vector.load %arg5[%c0_7, %c0_8] : memref<768x128xi8, #tpu.memory_space<vmem>>, vector<768x128xi8>
    %12 = arith.sitofp %11 : vector<768x128xi8> to vector<768x128xbf16>
    %13 = arith.truncf %10 : vector<16x768xf32> to vector<16x768xbf16>
    %cst_9 = arith.constant dense<0.000000e+00> : vector<16x128xf32>
    %14 = tpu.matmul %13, %12, %cst_9 {dimension_numbers = #tpu.dot_dimension_numbers<[1], [0], [0], [1], [0, 0, 1, 1], [], []>} : vector<16x768xbf16>, vector<768x128xbf16>, vector<16x128xf32> -> vector<16x128xf32>
    %c0_10 = arith.constant 0 : index
    %c0_11 = arith.constant 0 : index
    %15 = vector.load %arg6[%c0_10, %c0_11] : memref<1x128xf32, #tpu.memory_space<vmem>>, vector<1x128xf32>
    %16 = vector.broadcast %15 : vector<1x128xf32> to vector<16x128xf32>
    %17 = arith.mulf %14, %16 : vector<16x128xf32>
    %c0_12 = arith.constant 0 : index
    %c0_13 = arith.constant 0 : index
    %18 = vector.load %arg7[%c0_12, %c0_13] : memref<1x128xf32, #tpu.memory_space<vmem>>, vector<1x128xf32>
    %19 = vector.broadcast %18 : vector<1x128xf32> to vector<16x128xf32>
    %20 = arith.addf %17, %19 : vector<16x128xf32>
    %cst_14 = arith.constant 0.00999999977 : f32
    %21 = vector.broadcast %cst_14 : f32 to vector<16x128xf32>
    %22 = arith.mulf %21, %20 : vector<16x128xf32>
    %23 = arith.maximumf %20, %22 : vector<16x128xf32>
    %24 = arith.truncf %23 : vector<16x128xf32> to vector<16x128xbf16>
    %c0_15 = arith.constant 0 : index
    %c0_16 = arith.constant 0 : index
    %25 = vector.load %arg8[%c0_15, %c0_16] : memref<128x128xbf16, #tpu.memory_space<vmem>>, vector<128x128xbf16>
    %cst_17 = arith.constant dense<0.000000e+00> : vector<16x128xf32>
    %26 = tpu.matmul %24, %25, %cst_17 {dimension_numbers = #tpu.dot_dimension_numbers<[1], [0], [0], [1], [0, 0, 1, 1], [], []>} : vector<16x128xbf16>, vector<128x128xbf16>, vector<16x128xf32> -> vector<16x128xf32>
    %c0_18 = arith.constant 0 : index
    %c0_19 = arith.constant 0 : index
    %27 = vector.load %arg9[%c0_18, %c0_19] : memref<1x128xf32, #tpu.memory_space<vmem>>, vector<1x128xf32>
    %28 = vector.broadcast %27 : vector<1x128xf32> to vector<16x128xf32>
    %29 = arith.addf %26, %28 : vector<16x128xf32>
    %c0_20 = arith.constant 0 : index
    %c0_21 = arith.constant 0 : index
    %30 = vector.load %arg10[%c0_20, %c0_21] : memref<16x128xf32, #tpu.memory_space<vmem>>, vector<16x128xf32>
    tpu.vector_store %arg10[%c0_20, %c0_21], %29 {strides = array<i32>} : memref<16x128xf32, #tpu.memory_space<vmem>>, vector<16x128xf32>,
    return
  }
  func.func @transform_0(%arg0: i32) -> (i32, i32) {
    %c0_i32 = arith.constant 0 : i32
    %c0_i32_0 = arith.constant 0 : i32
    return %arg0, %c0_i32 : i32, i32
  }
  func.func @transform_1(%arg0: i32) -> (i32, i32) {
    %c0_i32 = arith.constant 0 : i32
    %c0_i32_0 = arith.constant 0 : i32
    %c0_i32_1 = arith.constant 0 : i32
    return %c0_i32, %c0_i32_0 : i32, i32
  }
  func.func @transform_2(%arg0: i32) -> (i32, i32) {
    %c0_i32 = arith.constant 0 : i32
    %c0_i32_0 = arith.constant 0 : i32
    %c0_i32_1 = arith.constant 0 : i32
    return %c0_i32, %c0_i32_0 : i32, i32
  }
  func.func @transform_3(%arg0: i32) -> (i32, i32) {
    %c0_i32 = arith.constant 0 : i32
    %c0_i32_0 = arith.constant 0 : i32
    %c0_i32_1 = arith.constant 0 : i32
    return %c0_i32, %c0_i32_0 : i32, i32
  }
  func.func @transform_4(%arg0: i32) -> (i32, i32) {
    %c0_i32 = arith.constant 0 : i32
    %c0_i32_0 = arith.constant 0 : i32
    %c0_i32_1 = arith.constant 0 : i32
    return %c0_i32, %c0_i32_0 : i32, i32
  }
  func.func @transform_5(%arg0: i32) -> (i32, i32) {
    %c0_i32 = arith.constant 0 : i32
    %c0_i32_0 = arith.constant 0 : i32
    %c0_i32_1 = arith.constant 0 : i32
    return %c0_i32, %c0_i32_0 : i32, i32
  }
  func.func @transform_6(%arg0: i32) -> (i32, i32) {
    %c0_i32 = arith.constant 0 : i32
    %c0_i32_0 = arith.constant 0 : i32
    %c0_i32_1 = arith.constant 0 : i32
    return %c0_i32, %c0_i32_0 : i32, i32
  }
  func.func @transform_7(%arg0: i32) -> (i32, i32) {
    %c0_i32 = arith.constant 0 : i32
    %c0_i32_0 = arith.constant 0 : i32
    %c0_i32_1 = arith.constant 0 : i32
    return %c0_i32, %c0_i32_0 : i32, i32
  }
  func.func @transform_8(%arg0: i32) -> (i32, i32) {
    %c0_i32 = arith.constant 0 : i32
    %c0_i32_0 = arith.constant 0 : i32
    %c0_i32_1 = arith.constant 0 : i32
    return %c0_i32, %c0_i32_0 : i32, i32
  }
  func.func @transform_9(%arg0: i32) -> (i32, i32) {
    %c0_i32 = arith.constant 0 : i32
    %c0_i32_0 = arith.constant 0 : i32
    return %arg0, %c0_i32 : i32, i32
  }
}

</mosaic_0001>

<llo_original>
// kernel: tpu_custom_call.1
$region0: #{tpu_custom_call.1}
  #allocation0 [shape = 'u32[]', space=smem, size = 0x4, offset = 0x4, fixed_abs, tag = 'smem constant byte address 0x4 - core index']
  #allocation1 [shape = 'u32[144,128]{1,0:T(1,128)}', space=vmem, size = 0x12000, scoped, tag = 'internal scratch']
  %s0 = inlined_call_operand.hbm [shape: bf16[16,768], index: 0, kind: input, shape index: {}]
  %s1 = inlined_call_operand.hbm [shape: s8[768,768], index: 1, kind: input, shape index: {}]
  %s2 = inlined_call_operand.vmem [shape: f32[1,768], index: 2, kind: input, shape index: {}]
  %s3 = inlined_call_operand.hbm [shape: f32[1,768], index: 3, kind: input, shape index: {}]
  %s4 = inlined_call_operand.hbm [shape: s8[768,128], index: 4, kind: input, shape index: {}]
  %s5 = inlined_call_operand.vmem [shape: f32[1,128], index: 5, kind: input, shape index: {}]
  %s6 = inlined_call_operand.vmem [shape: f32[1,128], index: 6, kind: input, shape index: {}]
  %s7 = inlined_call_operand.hbm [shape: bf16[128,128], index: 7, kind: input, shape index: {}]
  %s8 = inlined_call_operand.vmem [shape: f32[1,128], index: 8, kind: input, shape index: {}]
  %s9 = inlined_call_operand.hbm [shape: f32[16,128], index: 9, kind: output, shape index: {}]
  %s10 = sld [smem:[#allocation0]]
  $region66: #{tpu_custom_call.1} parent=0
    _
  %s12 = ssub.s32 1, %s10
  %s13 = scalar_select 0, %s12, %s10
  $region1: #{tpu_custom_call.1} parent=0
    #allocation2 [shape = 'u8[24576]{0}', space=vmem, size = 0x6000, scoped, tag = 'input window, operand 0, single buffered']
    #allocation3 [shape = 's32[1]{0}', space=sflag, size = 0x4, scoped, tag = 'scoped memory for tpu_custom_call.1']
    #allocation4 [shape = 's32[1]{0}', space=sflag, size = 0x4, scoped, tag = 'scoped memory for tpu_custom_call.1']
    #allocation5 [shape = 'u8[589824]{0}', space=vmem, size = 0x90000, scoped, tag = 'input window, operand 1, single buffered']
    #allocation6 [shape = 's32[1]{0}', space=sflag, size = 0x4, scoped, tag = 'scoped memory for tpu_custom_call.1']
    #allocation7 [shape = 'u8[3072]{0}', space=vmem, size = 0xc00, scoped, tag = 'input window, operand 3, single buffered']
    #allocation8 [shape = 'u8[98304]{0}', space=vmem, size = 0x18000, scoped, tag = 'input window, operand 4, single buffered']
    #allocation9 [shape = 's32[1]{0}', space=sflag, size = 0x4, scoped, tag = 'scoped memory for tpu_custom_call.1']
    #allocation10 [shape = 'u8[32768]{0}', space=vmem, size = 0x8000, scoped, tag = 'input window, operand 7, single buffered']
    #allocation11 [shape = 'u8[8192]{0}', space=vmem, size = 0x2000, scoped, tag = 'output window, operand 0, single buffered']
    %14 = vsyncpa [#allocation3], 0
    %15 = vsyncpa [#allocation6], 0
    %16 = vsyncpa [#allocation9], 0
    %17 = vsyncpa [#allocation4], 0
    // Predicated region
    $region2: #{tpu_custom_call.1} parent=1 // pred_check
      _
    $region3: #{tpu_custom_call.1} parent=1 // pred_check_branch
      %19 = sbr.rel (0) target = $region5
    $region4: #{tpu_custom_call.1} parent=1 // pred_region
      %s21 = ssub.s32 768, 768
      %22 = vsyncadd [#allocation3], %s21
      %s23 = sshll.u32 [#allocation2], 4
      %s24 = int_to_ptr.vmem [resolvable:$true] %s23
      %29 = dma.hbm_to_vmem [thread:$0]  %s0, 768, %s24, [#allocation3], 384, 384, 24
    $region5: #{tpu_custom_call.1} parent=1 // pred_fallthru
      _
    // Predicated region
    $region6: #{tpu_custom_call.1} parent=1 // pred_check
      _
    $region7: #{tpu_custom_call.1} parent=1 // pred_check_branch
      %31 = sbr.rel (0) target = $region9
    $region8: #{tpu_custom_call.1} parent=1 // pred_region
      %s33 = ssub.s32 18432, 18432
      %34 = vsyncadd [#allocation6], %s33
      %s35 = sshll.u32 [#allocation5], 4
      %s36 = int_to_ptr.vmem [resolvable:$true] %s35
      %41 = dma.hbm_to_vmem [thread:$0]  %s1, 18432, %s36, [#allocation6], 768, 768, 48
    $region9: #{tpu_custom_call.1} parent=1 // pred_fallthru
      _
    // Predicated region
    $region10: #{tpu_custom_call.1} parent=1 // pred_check
      _
    $region11: #{tpu_custom_call.1} parent=1 // pred_check_branch
      %43 = sbr.rel (0) target = $region13
    $region12: #{tpu_custom_call.1} parent=1 // pred_region
      _
    $region13: #{tpu_custom_call.1} parent=1 // pred_fallthru
      _
    // Predicated region
    $region14: #{tpu_custom_call.1} parent=1 // pred_check
      _
    $region15: #{tpu_custom_call.1} parent=1 // pred_check_branch
      %45 = sbr.rel (0) target = $region17
    $region16: #{tpu_custom_call.1} parent=1 // pred_region
      %s47 = ssub.s32 96, 96
      %48 = vsyncadd [#allocation6], %s47
      %s50 = sshll.u32 [#allocation7], 4
      %s51 = int_to_ptr.vmem [resolvable:$true] %s50
      %53 = dma.hbm_to_vmem [thread:$0]  %s3, 96, %s51, [#allocation6]
    $region17: #{tpu_custom_call.1} parent=1 // pred_fallthru
      _
    // Predicated region
    $region18: #{tpu_custom_call.1} parent=1 // pred_check
      _
    $region19: #{tpu_custom_call.1} parent=1 // pred_check_branch
      %55 = sbr.rel (0) target = $region21
    $region20: #{tpu_custom_call.1} parent=1 // pred_region
      %s57 = ssub.s32 3072, 3072
      %58 = vsyncadd [#allocation9], %s57
      %s59 = sshll.u32 [#allocation8], 4
      %s60 = int_to_ptr.vmem [resolvable:$true] %s59
      %65 = dma.hbm_to_vmem [thread:$0]  %s4, 3072, %s60, [#allocation9], 128, 128, 8
    $region21: #{tpu_custom_call.1} parent=1 // pred_fallthru
      _
    // Predicated region
    $region22: #{tpu_custom_call.1} parent=1 // pred_check
      _
    $region23: #{tpu_custom_call.1} parent=1 // pred_check_branch
      %67 = sbr.rel (0) target = $region25
    $region24: #{tpu_custom_call.1} parent=1 // pred_region
      _
    $region25: #{tpu_custom_call.1} parent=1 // pred_fallthru
      _
    // Predicated region
    $region26: #{tpu_custom_call.1} parent=1 // pred_check
      _
    $region27: #{tpu_custom_call.1} parent=1 // pred_check_branch
      %69 = sbr.rel (0) target = $region29
    $region28: #{tpu_custom_call.1} parent=1 // pred_region
      _
    $region29: #{tpu_custom_call.1} parent=1 // pred_fallthru
      _
    // Predicated region
    $region30: #{tpu_custom_call.1} parent=1 // pred_check
      _
    $region31: #{tpu_custom_call.1} parent=1 // pred_check_branch
      %71 = sbr.rel (0) target = $region33
    $region32: #{tpu_custom_call.1} parent=1 // pred_region
      %s73 = ssub.s32 1024, 1024
      %74 = vsyncadd [#allocation9], %s73
      %s75 = sshll.u32 [#allocation10], 4
      %s76 = int_to_ptr.vmem [resolvable:$true] %s75
      %81 = dma.hbm_to_vmem [thread:$0]  %s7, 1024, %s76, [#allocation9], 64, 64, 4
    $region33: #{tpu_custom_call.1} parent=1 // pred_fallthru
      _
    // Predicated region
    $region34: #{tpu_custom_call.1} parent=1 // pred_check
      _
    $region35: #{tpu_custom_call.1} parent=1 // pred_check_branch
      %83 = sbr.rel (0) target = $region37
    $region36: #{tpu_custom_call.1} parent=1 // pred_region
      _
    $region37: #{tpu_custom_call.1} parent=1 // pred_fallthru
      _
    // Predicated region
    $region38: #{tpu_custom_call.1} parent=1 // pred_check
      _
    $region39: #{tpu_custom_call.1} parent=1 // pred_check_branch
      %85 = sbr.rel (0) target = $region41
    $region40: #{tpu_custom_call.1} parent=1 // pred_region
      %86 = dma.done [#allocation3], 768
    $region41: #{tpu_custom_call.1} parent=1 // pred_fallthru
      _
    // Predicated region
    $region42: #{tpu_custom_call.1} parent=1 // pred_check
      _
    $region43: #{tpu_custom_call.1} parent=1 // pred_check_branch
      %88 = sbr.rel (0) target = $region45
    $region44: #{tpu_custom_call.1} parent=1 // pred_region
      %89 = dma.done [#allocation6], 18432
    $region45: #{tpu_custom_call.1} parent=1 // pred_fallthru
      _
    // Predicated region
    $region46: #{tpu_custom_call.1} parent=1 // pred_check
      _
    $region47: #{tpu_custom_call.1} parent=1 // pred_check_branch
      %91 = sbr.rel (0) target = $region49
    $region48: #{tpu_custom_call.1} parent=1 // pred_region
      %92 = dma.done [#allocation6], 96
    $region49: #{tpu_custom_call.1} parent=1 // pred_fallthru
      _
    // Predicated region
    $region50: #{tpu_custom_call.1} parent=1 // pred_check
      _
    $region51: #{tpu_custom_call.1} parent=1 // pred_check_branch
      %94 = sbr.rel (0) target = $region53
    $region52: #{tpu_custom_call.1} parent=1 // pred_region
      %95 = dma.done [#allocation9], 3072
    $region53: #{tpu_custom_call.1} parent=1 // pred_fallthru
      _
    // Predicated region
    $region54: #{tpu_custom_call.1} parent=1 // pred_check
      _
    $region55: #{tpu_custom_call.1} parent=1 // pred_check_branch
      %97 = sbr.rel (0) target = $region57
    $region56: #{tpu_custom_call.1} parent=1 // pred_region
      %98 = dma.done [#allocation9], 1024
    $region57: #{tpu_custom_call.1} parent=1 // pred_fallthru
      _
    %v100 = vld [vmem:[#allocation2] sm:$0xff]
    %v101 = vld [vmem:[#allocation2 + $0x8] sm:$0xff]
    %v102 = vld [vmem:[#allocation2 + $0x10] sm:$0xff]
    %v103 = vld [vmem:[#allocation2 + $0x18] sm:$0xff]
    %v104 = vld [vmem:[#allocation2 + $0x20] sm:$0xff]
    %v105 = vld [vmem:[#allocation2 + $0x28] sm:$0xff]
    %v106 = vld [vmem:[#allocation5] sm:$0xff]
    %v107 = vld [vmem:[#allocation5 + $0x8] sm:$0xff]
    %v108 = vld [vmem:[#allocation5 + $0x10] sm:$0xff]
    %v109 = vld [vmem:[#allocation5 + $0x18] sm:$0xff]
    %v110 = vld [vmem:[#allocation5 + $0x20] sm:$0xff]
    %v111 = vld [vmem:[#allocation5 + $0x28] sm:$0xff]
    %v112 = vld [vmem:[#allocation5 + $0x30] sm:$0xff]
    %v113 = vld [vmem:[#allocation5 + $0x38] sm:$0xff]
    %v114 = vld [vmem:[#allocation5 + $0x40] sm:$0xff]
    %v115 = vld [vmem:[#allocation5 + $0x48] sm:$0xff]
    %v116 = vld [vmem:[#allocation5 + $0x50] sm:$0xff]
    %v117 = vld [vmem:[#allocation5 + $0x58] sm:$0xff]
    %v118 = vld [vmem:[#allocation5 + $0x60] sm:$0xff]
    %v119 = vld [vmem:[#allocation5 + $0x68] sm:$0xff]
    %v120 = vld [vmem:[#allocation5 + $0x70] sm:$0xff]
    %v121 = vld [vmem:[#allocation5 + $0x78] sm:$0xff]
    %v122 = vld [vmem:[#allocation5 + $0x80] sm:$0xff]
    %v123 = vld [vmem:[#allocation5 + $0x88] sm:$0xff]
    %v124 = vld [vmem:[#allocation5 + $0x90] sm:$0xff]
    %v125 = vld [vmem:[#allocation5 + $0x98] sm:$0xff]
    %v126 = vld [vmem:[#allocation5 + $0xa0] sm:$0xff]
    %v127 = vld [vmem:[#allocation5 + $0xa8] sm:$0xff]
    %v128 = vld [vmem:[#allocation5 + $0xb0] sm:$0xff]
    %v129 = vld [vmem:[#allocation5 + $0xb8] sm:$0xff]
    %v130 = vld [vmem:[#allocation5 + $0xc0] sm:$0xff]
    %v131 = vld [vmem:[#allocation5 + $0xc8] sm:$0xff]
    %v132 = vld [vmem:[#allocation5 + $0xd0] sm:$0xff]
    %v133 = vld [vmem:[#allocation5 + $0xd8] sm:$0xff]
    %v134 = vld [vmem:[#allocation5 + $0xe0] sm:$0xff]
    %v135 = vld [vmem:[#allocation5 + $0xe8] sm:$0xff]
    %v136 = vld [vmem:[#allocation5 + $0xf0] sm:$0xff]
    %v137 = vld [vmem:[#allocation5 + $0xf8] sm:$0xff]
    %v138 = vld [vmem:[#allocation5 + $0x100] sm:$0xff]
    %v139 = vld [vmem:[#allocation5 + $0x108] sm:$0xff]
    %v140 = vld [vmem:[#allocation5 + $0x110] sm:$0xff]
    %v141 = vld [vmem:[#allocation5 + $0x118] sm:$0xff]
    %v142 = vld [vmem:[#allocation5 + $0x120] sm:$0xff]
    %v143 = vld [vmem:[#allocation5 + $0x128] sm:$0xff]
    %v144 = vld [vmem:[#allocation5 + $0x130] sm:$0xff]
    %v145 = vld [vmem:[#allocation5 + $0x138] sm:$0xff]
    %v146 = vld [vmem:[#allocation5 + $0x140] sm:$0xff]
    %v147 = vld [vmem:[#allocation5 + $0x148] sm:$0xff]
    %v148 = vld [vmem:[#allocation5 + $0x150] sm:$0xff]
    %v149 = vld [vmem:[#allocation5 + $0x158] sm:$0xff]
    %v150 = vld [vmem:[#allocation5 + $0x160] sm:$0xff]
    %v151 = vld [vmem:[#allocation5 + $0x168] sm:$0xff]
    %v152 = vld [vmem:[#allocation5 + $0x170] sm:$0xff]
    %v153 = vld [vmem:[#allocation5 + $0x178] sm:$0xff]
    %v154 = vld [vmem:[#allocation5 + $0x180] sm:$0xff]
    %v155 = vld [vmem:[#allocation5 + $0x188] sm:$0xff]
    %v156 = vld [vmem:[#allocation5 + $0x190] sm:$0xff]
    %v157 = vld [vmem:[#allocation5 + $0x198] sm:$0xff]
    %v158 = vld [vmem:[#allocation5 + $0x1a0] sm:$0xff]
    %v159 = vld [vmem:[#allocation5 + $0x1a8] sm:$0xff]
    %v160 = vld [vmem:[#allocation5 + $0x1b0] sm:$0xff]
    %v161 = vld [vmem:[#allocation5 + $0x1b8] sm:$0xff]
    %v162 = vld [vmem:[#allocation5 + $0x1c0] sm:$0xff]
    %v163 = vld [vmem:[#allocation5 + $0x1c8] sm:$0xff]
    %v164 = vld [vmem:[#allocation5 + $0x1d0] sm:$0xff]
    %v165 = vld [vmem:[#allocation5 + $0x1d8] sm:$0xff]
    %v166 = vld [vmem:[#allocation5 + $0x1e0] sm:$0xff]
    %v167 = vld [vmem:[#allocation5 + $0x1e8] sm:$0xff]
    %v168 = vld [vmem:[#allocation5 + $0x1f0] sm:$0xff]
    %v169 = vld [vmem:[#allocation5 + $0x1f8] sm:$0xff]
    %v170 = vld [vmem:[#allocation5 + $0x200] sm:$0xff]
    %v171 = vld [vmem:[#allocation5 + $0x208] sm:$0xff]
    %v172 = vld [vmem:[#allocation5 + $0x210] sm:$0xff]
    %v173 = vld [vmem:[#allocation5 + $0x218] sm:$0xff]
    %v174 = vld [vmem:[#allocation5 + $0x220] sm:$0xff]
    %v175 = vld [vmem:[#allocation5 + $0x228] sm:$0xff]
    %v176 = vld [vmem:[#allocation5 + $0x230] sm:$0xff]
    %v177 = vld [vmem:[#allocation5 + $0x238] sm:$0xff]
    %v178 = vld [vmem:[#allocation5 + $0x240] sm:$0xff]
    %v179 = vld [vmem:[#allocation5 + $0x248] sm:$0xff]
    %v180 = vld [vmem:[#allocation5 + $0x250] sm:$0xff]
    %v181 = vld [vmem:[#allocation5 + $0x258] sm:$0xff]
    %v182 = vld [vmem:[#allocation5 + $0x260] sm:$0xff]
    %v183 = vld [vmem:[#allocation5 + $0x268] sm:$0xff]
    %v184 = vld [vmem:[#allocation5 + $0x270] sm:$0xff]
    %v185 = vld [vmem:[#allocation5 + $0x278] sm:$0xff]
    %v186 = vld [vmem:[#allocation5 + $0x280] sm:$0xff]
    %v187 = vld [vmem:[#allocation5 + $0x288] sm:$0xff]
    %v188 = vld [vmem:[#allocation5 + $0x290] sm:$0xff]
    %v189 = vld [vmem:[#allocation5 + $0x298] sm:$0xff]
    %v190 = vld [vmem:[#allocation5 + $0x2a0] sm:$0xff]
    %v191 = vld [vmem:[#allocation5 + $0x2a8] sm:$0xff]
    %v192 = vld [vmem:[#allocation5 + $0x2b0] sm:$0xff]
    %v193 = vld [vmem:[#allocation5 + $0x2b8] sm:$0xff]
    %v194 = vld [vmem:[#allocation5 + $0x2c0] sm:$0xff]
    %v195 = vld [vmem:[#allocation5 + $0x2c8] sm:$0xff]
    %v196 = vld [vmem:[#allocation5 + $0x2d0] sm:$0xff]
    %v197 = vld [vmem:[#allocation5 + $0x2d8] sm:$0xff]
    %v198 = vld [vmem:[#allocation5 + $0x2e0] sm:$0xff]
    %v199 = vld [vmem:[#allocation5 + $0x2e8] sm:$0xff]
    %v200 = vld [vmem:[#allocation5 + $0x2f0] sm:$0xff]
    %v201 = vld [vmem:[#allocation5 + $0x2f8] sm:$0xff]
    %v202 = vld [vmem:[#allocation5 + $0x300] sm:$0xff]
    %v203 = vld [vmem:[#allocation5 + $0x308] sm:$0xff]
    %v204 = vld [vmem:[#allocation5 + $0x310] sm:$0xff]
    %v205 = vld [vmem:[#allocation5 + $0x318] sm:$0xff]
    %v206 = vld [vmem:[#allocation5 + $0x320] sm:$0xff]
    %v207 = vld [vmem:[#allocation5 + $0x328] sm:$0xff]
    %v208 = vld [vmem:[#allocation5 + $0x330] sm:$0xff]
    %v209 = vld [vmem:[#allocation5 + $0x338] sm:$0xff]
    %v210 = vld [vmem:[#allocation5 + $0x340] sm:$0xff]
    %v211 = vld [vmem:[#allocation5 + $0x348] sm:$0xff]
    %v212 = vld [vmem:[#allocation5 + $0x350] sm:$0xff]
    %v213 = vld [vmem:[#allocation5 + $0x358] sm:$0xff]
    %v214 = vld [vmem:[#allocation5 + $0x360] sm:$0xff]
    %v215 = vld [vmem:[#allocation5 + $0x368] sm:$0xff]
    %v216 = vld [vmem:[#allocation5 + $0x370] sm:$0xff]
    %v217 = vld [vmem:[#allocation5 + $0x378] sm:$0xff]
    %v218 = vld [vmem:[#allocation5 + $0x380] sm:$0xff]
    %v219 = vld [vmem:[#allocation5 + $0x388] sm:$0xff]
    %v220 = vld [vmem:[#allocation5 + $0x390] sm:$0xff]
    %v221 = vld [vmem:[#allocation5 + $0x398] sm:$0xff]
    %v222 = vld [vmem:[#allocation5 + $0x3a0] sm:$0xff]
    %v223 = vld [vmem:[#allocation5 + $0x3a8] sm:$0xff]
    %v224 = vld [vmem:[#allocation5 + $0x3b0] sm:$0xff]
    %v225 = vld [vmem:[#allocation5 + $0x3b8] sm:$0xff]
    %v226 = vld [vmem:[#allocation5 + $0x3c0] sm:$0xff]
    %v227 = vld [vmem:[#allocation5 + $0x3c8] sm:$0xff]
    %v228 = vld [vmem:[#allocation5 + $0x3d0] sm:$0xff]
    %v229 = vld [vmem:[#allocation5 + $0x3d8] sm:$0xff]
    %v230 = vld [vmem:[#allocation5 + $0x3e0] sm:$0xff]
    %v231 = vld [vmem:[#allocation5 + $0x3e8] sm:$0xff]
    %v232 = vld [vmem:[#allocation5 + $0x3f0] sm:$0xff]
    %v233 = vld [vmem:[#allocation5 + $0x3f8] sm:$0xff]
    %v234 = vld [vmem:[#allocation5 + $0x400] sm:$0xff]
    %v235 = vld [vmem:[#allocation5 + $0x408] sm:$0xff]
    %v236 = vld [vmem:[#allocation5 + $0x410] sm:$0xff]
    %v237 = vld [vmem:[#allocation5 + $0x418] sm:$0xff]
    %v238 = vld [vmem:[#allocation5 + $0x420] sm:$0xff]
    %v239 = vld [vmem:[#allocation5 + $0x428] sm:$0xff]
    %v240 = vld [vmem:[#allocation5 + $0x430] sm:$0xff]
    %v241 = vld [vmem:[#allocation5 + $0x438] sm:$0xff]
    %v242 = vld [vmem:[#allocation5 + $0x440] sm:$0xff]
    %v243 = vld [vmem:[#allocation5 + $0x448] sm:$0xff]
    %v244 = vld [vmem:[#allocation5 + $0x450] sm:$0xff]
    %v245 = vld [vmem:[#allocation5 + $0x458] sm:$0xff]
    %v246 = vld [vmem:[#allocation5 + $0x460] sm:$0xff]
    %v247 = vld [vmem:[#allocation5 + $0x468] sm:$0xff]
    %v248 = vld [vmem:[#allocation5 + $0x470] sm:$0xff]
    %v249 = vld [vmem:[#allocation5 + $0x478] sm:$0xff]
    %v250 = vunpack.c.l.s8.bf16 %v106
    %v251 = vunpack.c.l.s8.bf16 %v107
    %v252 = vunpack.c.l.s8.bf16 %v108
    %v253 = vunpack.c.l.s8.bf16 %v109
    %v254 = vunpack.c.l.s8.bf16 %v110
    %v255 = vunpack.c.l.s8.bf16 %v111
    %v256 = vunpack.c.h.s8.bf16 %v106
    %v257 = vunpack.c.h.s8.bf16 %v107
    %v258 = vunpack.c.h.s8.bf16 %v108
    %v259 = vunpack.c.h.s8.bf16 %v109
    %v260 = vunpack.c.h.s8.bf16 %v110
    %v261 = vunpack.c.h.s8.bf16 %v111
    %v262 = vunpack.c.l.s8.bf16 %v112
    %v263 = vunpack.c.l.s8.bf16 %v113
    %v264 = vunpack.c.l.s8.bf16 %v114
    %v265 = vunpack.c.l.s8.bf16 %v115
    %v266 = vunpack.c.l.s8.bf16 %v116
    %v267 = vunpack.c.l.s8.bf16 %v117
    %v268 = vunpack.c.h.s8.bf16 %v112
    %v269 = vunpack.c.h.s8.bf16 %v113
    %v270 = vunpack.c.h.s8.bf16 %v114
    %v271 = vunpack.c.h.s8.bf16 %v115
    %v272 = vunpack.c.h.s8.bf16 %v116
    %v273 = vunpack.c.h.s8.bf16 %v117
    %v274 = vunpack.c.l.s8.bf16 %v118
    %v275 = vunpack.c.l.s8.bf16 %v119
    %v276 = vunpack.c.l.s8.bf16 %v120
    %v277 = vunpack.c.l.s8.bf16 %v121
    %v278 = vunpack.c.l.s8.bf16 %v122
    %v279 = vunpack.c.l.s8.bf16 %v123
    %v280 = vunpack.c.h.s8.bf16 %v118
    %v281 = vunpack.c.h.s8.bf16 %v119
    %v282 = vunpack.c.h.s8.bf16 %v120
    %v283 = vunpack.c.h.s8.bf16 %v121
    %v284 = vunpack.c.h.s8.bf16 %v122
    %v285 = vunpack.c.h.s8.bf16 %v123
    %v286 = vunpack.c.l.s8.bf16 %v124
    %v287 = vunpack.c.l.s8.bf16 %v125
    %v288 = vunpack.c.l.s8.bf16 %v126
    %v289 = vunpack.c.l.s8.bf16 %v127
    %v290 = vunpack.c.l.s8.bf16 %v128
    %v291 = vunpack.c.l.s8.bf16 %v129
    %v292 = vunpack.c.h.s8.bf16 %v124
    %v293 = vunpack.c.h.s8.bf16 %v125
    %v294 = vunpack.c.h.s8.bf16 %v126
    %v295 = vunpack.c.h.s8.bf16 %v127
    %v296 = vunpack.c.h.s8.bf16 %v128
    %v297 = vunpack.c.h.s8.bf16 %v129
    %v298 = vunpack.c.l.s8.bf16 %v130
    %v299 = vunpack.c.l.s8.bf16 %v131
    %v300 = vunpack.c.l.s8.bf16 %v132
    %v301 = vunpack.c.l.s8.bf16 %v133
    %v302 = vunpack.c.l.s8.bf16 %v134
    %v303 = vunpack.c.l.s8.bf16 %v135
    %v304 = vunpack.c.h.s8.bf16 %v130
    %v305 = vunpack.c.h.s8.bf16 %v131
    %v306 = vunpack.c.h.s8.bf16 %v132
    %v307 = vunpack.c.h.s8.bf16 %v133
    %v308 = vunpack.c.h.s8.bf16 %v134
    %v309 = vunpack.c.h.s8.bf16 %v135
    %v310 = vunpack.c.l.s8.bf16 %v136
    %v311 = vunpack.c.l.s8.bf16 %v137
    %v312 = vunpack.c.l.s8.bf16 %v138
    %v313 = vunpack.c.l.s8.bf16 %v139
    %v314 = vunpack.c.l.s8.bf16 %v140
    %v315 = vunpack.c.l.s8.bf16 %v141
    %v316 = vunpack.c.h.s8.bf16 %v136
    %v317 = vunpack.c.h.s8.bf16 %v137
    %v318 = vunpack.c.h.s8.bf16 %v138
    %v319 = vunpack.c.h.s8.bf16 %v139
    %v320 = vunpack.c.h.s8.bf16 %v140
    %v321 = vunpack.c.h.s8.bf16 %v141
    %v322 = vunpack.c.l.s8.bf16 %v142
    %v323 = vunpack.c.l.s8.bf16 %v143
    %v324 = vunpack.c.l.s8.bf16 %v144
    %v325 = vunpack.c.l.s8.bf16 %v145
    %v326 = vunpack.c.l.s8.bf16 %v146
    %v327 = vunpack.c.l.s8.bf16 %v147
    %v328 = vunpack.c.h.s8.bf16 %v142
    %v329 = vunpack.c.h.s8.bf16 %v143
    %v330 = vunpack.c.h.s8.bf16 %v144
    %v331 = vunpack.c.h.s8.bf16 %v145
    %v332 = vunpack.c.h.s8.bf16 %v146
    %v333 = vunpack.c.h.s8.bf16 %v147
    %v334 = vunpack.c.l.s8.bf16 %v148
    %v335 = vunpack.c.l.s8.bf16 %v149
    %v336 = vunpack.c.l.s8.bf16 %v150
    %v337 = vunpack.c.l.s8.bf16 %v151
    %v338 = vunpack.c.l.s8.bf16 %v152
    %v339 = vunpack.c.l.s8.bf16 %v153
    %v340 = vunpack.c.h.s8.bf16 %v148
    %v341 = vunpack.c.h.s8.bf16 %v149
    %v342 = vunpack.c.h.s8.bf16 %v150
    %v343 = vunpack.c.h.s8.bf16 %v151
    %v344 = vunpack.c.h.s8.bf16 %v152
    %v345 = vunpack.c.h.s8.bf16 %v153
    %v346 = vunpack.c.l.s8.bf16 %v154
    %v347 = vunpack.c.l.s8.bf16 %v155
    %v348 = vunpack.c.l.s8.bf16 %v156
    %v349 = vunpack.c.l.s8.bf16 %v157
    %v350 = vunpack.c.l.s8.bf16 %v158
    %v351 = vunpack.c.l.s8.bf16 %v159
    %v352 = vunpack.c.h.s8.bf16 %v154
    %v353 = vunpack.c.h.s8.bf16 %v155
    %v354 = vunpack.c.h.s8.bf16 %v156
    %v355 = vunpack.c.h.s8.bf16 %v157
    %v356 = vunpack.c.h.s8.bf16 %v158
    %v357 = vunpack.c.h.s8.bf16 %v159
    %v358 = vunpack.c.l.s8.bf16 %v160
    %v359 = vunpack.c.l.s8.bf16 %v161
    %v360 = vunpack.c.l.s8.bf16 %v162
    %v361 = vunpack.c.l.s8.bf16 %v163
    %v362 = vunpack.c.l.s8.bf16 %v164
    %v363 = vunpack.c.l.s8.bf16 %v165
    %v364 = vunpack.c.h.s8.bf16 %v160
    %v365 = vunpack.c.h.s8.bf16 %v161
    %v366 = vunpack.c.h.s8.bf16 %v162
    %v367 = vunpack.c.h.s8.bf16 %v163
    %v368 = vunpack.c.h.s8.bf16 %v164
    %v369 = vunpack.c.h.s8.bf16 %v165
    %v370 = vunpack.c.l.s8.bf16 %v166
    %v371 = vunpack.c.l.s8.bf16 %v167
    %v372 = vunpack.c.l.s8.bf16 %v168
    %v373 = vunpack.c.l.s8.bf16 %v169
    %v374 = vunpack.c.l.s8.bf16 %v170
    %v375 = vunpack.c.l.s8.bf16 %v171
    %v376 = vunpack.c.h.s8.bf16 %v166
    %v377 = vunpack.c.h.s8.bf16 %v167
    %v378 = vunpack.c.h.s8.bf16 %v168
    %v379 = vunpack.c.h.s8.bf16 %v169
    %v380 = vunpack.c.h.s8.bf16 %v170
    %v381 = vunpack.c.h.s8.bf16 %v171
    %v382 = vunpack.c.l.s8.bf16 %v172
    %v383 = vunpack.c.l.s8.bf16 %v173
    %v384 = vunpack.c.l.s8.bf16 %v174
    %v385 = vunpack.c.l.s8.bf16 %v175
    %v386 = vunpack.c.l.s8.bf16 %v176
    %v387 = vunpack.c.l.s8.bf16 %v177
    %v388 = vunpack.c.h.s8.bf16 %v172
    %v389 = vunpack.c.h.s8.bf16 %v173
    %v390 = vunpack.c.h.s8.bf16 %v174
    %v391 = vunpack.c.h.s8.bf16 %v175
    %v392 = vunpack.c.h.s8.bf16 %v176
    %v393 = vunpack.c.h.s8.bf16 %v177
    %v394 = vunpack.c.l.s8.bf16 %v178
    %v395 = vunpack.c.l.s8.bf16 %v179
    %v396 = vunpack.c.l.s8.bf16 %v180
    %v397 = vunpack.c.l.s8.bf16 %v181
    %v398 = vunpack.c.l.s8.bf16 %v182
    %v399 = vunpack.c.l.s8.bf16 %v183
    %v400 = vunpack.c.h.s8.bf16 %v178
    %v401 = vunpack.c.h.s8.bf16 %v179
    %v402 = vunpack.c.h.s8.bf16 %v180
    %v403 = vunpack.c.h.s8.bf16 %v181
    %v404 = vunpack.c.h.s8.bf16 %v182
    %v405 = vunpack.c.h.s8.bf16 %v183
    %v406 = vunpack.c.l.s8.bf16 %v184
    %v407 = vunpack.c.l.s8.bf16 %v185
    %v408 = vunpack.c.l.s8.bf16 %v186
    %v409 = vunpack.c.l.s8.bf16 %v187
    %v410 = vunpack.c.l.s8.bf16 %v188
    %v411 = vunpack.c.l.s8.bf16 %v189
    %v412 = vunpack.c.h.s8.bf16 %v184
    %v413 = vunpack.c.h.s8.bf16 %v185
    %v414 = vunpack.c.h.s8.bf16 %v186
    %v415 = vunpack.c.h.s8.bf16 %v187
    %v416 = vunpack.c.h.s8.bf16 %v188
    %v417 = vunpack.c.h.s8.bf16 %v189
    %v418 = vunpack.c.l.s8.bf16 %v190
    %v419 = vunpack.c.l.s8.bf16 %v191
    %v420 = vunpack.c.l.s8.bf16 %v192
    %v421 = vunpack.c.l.s8.bf16 %v193
    %v422 = vunpack.c.l.s8.bf16 %v194
    %v423 = vunpack.c.l.s8.bf16 %v195
    %v424 = vunpack.c.h.s8.bf16 %v190
    %v425 = vunpack.c.h.s8.bf16 %v191
    %v426 = vunpack.c.h.s8.bf16 %v192
    %v427 = vunpack.c.h.s8.bf16 %v193
    %v428 = vunpack.c.h.s8.bf16 %v194
    %v429 = vunpack.c.h.s8.bf16 %v195
    %v430 = vunpack.c.l.s8.bf16 %v196
    %v431 = vunpack.c.l.s8.bf16 %v197
    %v432 = vunpack.c.l.s8.bf16 %v198
    %v433 = vunpack.c.l.s8.bf16 %v199
    %v434 = vunpack.c.l.s8.bf16 %v200
    %v435 = vunpack.c.l.s8.bf16 %v201
    %v436 = vunpack.c.h.s8.bf16 %v196
    %v437 = vunpack.c.h.s8.bf16 %v197
    %v438 = vunpack.c.h.s8.bf16 %v198
    %v439 = vunpack.c.h.s8.bf16 %v199
    %v440 = vunpack.c.h.s8.bf16 %v200
    %v441 = vunpack.c.h.s8.bf16 %v201
    %v442 = vunpack.c.l.s8.bf16 %v202
    %v443 = vunpack.c.l.s8.bf16 %v203
    %v444 = vunpack.c.l.s8.bf16 %v204
    %v445 = vunpack.c.l.s8.bf16 %v205
    %v446 = vunpack.c.l.s8.bf16 %v206
    %v447 = vunpack.c.l.s8.bf16 %v207
    %v448 = vunpack.c.h.s8.bf16 %v202
    %v449 = vunpack.c.h.s8.bf16 %v203
    %v450 = vunpack.c.h.s8.bf16 %v204
    %v451 = vunpack.c.h.s8.bf16 %v205
    %v452 = vunpack.c.h.s8.bf16 %v206
    %v453 = vunpack.c.h.s8.bf16 %v207
    %v454 = vunpack.c.l.s8.bf16 %v208
    %v455 = vunpack.c.l.s8.bf16 %v209
    %v456 = vunpack.c.l.s8.bf16 %v210
    %v457 = vunpack.c.l.s8.bf16 %v211
    %v458 = vunpack.c.l.s8.bf16 %v212
    %v459 = vunpack.c.l.s8.bf16 %v213
    %v460 = vunpack.c.h.s8.bf16 %v208
    %v461 = vunpack.c.h.s8.bf16 %v209
    %v462 = vunpack.c.h.s8.bf16 %v210
    %v463 = vunpack.c.h.s8.bf16 %v211
    %v464 = vunpack.c.h.s8.bf16 %v212
    %v465 = vunpack.c.h.s8.bf16 %v213
    %v466 = vunpack.c.l.s8.bf16 %v214
    %v467 = vunpack.c.l.s8.bf16 %v215
    %v468 = vunpack.c.l.s8.bf16 %v216
    %v469 = vunpack.c.l.s8.bf16 %v217
    %v470 = vunpack.c.l.s8.bf16 %v218
    %v471 = vunpack.c.l.s8.bf16 %v219
    %v472 = vunpack.c.h.s8.bf16 %v214
    %v473 = vunpack.c.h.s8.bf16 %v215
    %v474 = vunpack.c.h.s8.bf16 %v216
    %v475 = vunpack.c.h.s8.bf16 %v217
    %v476 = vunpack.c.h.s8.bf16 %v218
    %v477 = vunpack.c.h.s8.bf16 %v219
    %v478 = vunpack.c.l.s8.bf16 %v220
    %v479 = vunpack.c.l.s8.bf16 %v221
    %v480 = vunpack.c.l.s8.bf16 %v222
    %v481 = vunpack.c.l.s8.bf16 %v223
    %v482 = vunpack.c.l.s8.bf16 %v224
    %v483 = vunpack.c.l.s8.bf16 %v225
    %v484 = vunpack.c.h.s8.bf16 %v220
    %v485 = vunpack.c.h.s8.bf16 %v221
    %v486 = vunpack.c.h.s8.bf16 %v222
    %v487 = vunpack.c.h.s8.bf16 %v223
    %v488 = vunpack.c.h.s8.bf16 %v224
    %v489 = vunpack.c.h.s8.bf16 %v225
    %v490 = vunpack.c.l.s8.bf16 %v226
    %v491 = vunpack.c.l.s8.bf16 %v227
    %v492 = vunpack.c.l.s8.bf16 %v228
    %v493 = vunpack.c.l.s8.bf16 %v229
    %v494 = vunpack.c.l.s8.bf16 %v230
    %v495 = vunpack.c.l.s8.bf16 %v231
    %v496 = vunpack.c.h.s8.bf16 %v226
    %v497 = vunpack.c.h.s8.bf16 %v227
    %v498 = vunpack.c.h.s8.bf16 %v228
    %v499 = vunpack.c.h.s8.bf16 %v229
    %v500 = vunpack.c.h.s8.bf16 %v230
    %v501 = vunpack.c.h.s8.bf16 %v231
    %v502 = vunpack.c.l.s8.bf16 %v232
    %v503 = vunpack.c.l.s8.bf16 %v233
    %v504 = vunpack.c.l.s8.bf16 %v234
    %v505 = vunpack.c.l.s8.bf16 %v235
    %v506 = vunpack.c.l.s8.bf16 %v236
    %v507 = vunpack.c.l.s8.bf16 %v237
    %v508 = vunpack.c.h.s8.bf16 %v232
    %v509 = vunpack.c.h.s8.bf16 %v233
    %v510 = vunpack.c.h.s8.bf16 %v234
    %v511 = vunpack.c.h.s8.bf16 %v235
    %v512 = vunpack.c.h.s8.bf16 %v236
    %v513 = vunpack.c.h.s8.bf16 %v237
    %v514 = vunpack.c.l.s8.bf16 %v238
    %v515 = vunpack.c.l.s8.bf16 %v239
    %v516 = vunpack.c.l.s8.bf16 %v240
    %v517 = vunpack.c.l.s8.bf16 %v241
    %v518 = vunpack.c.l.s8.bf16 %v242
    %v519 = vunpack.c.l.s8.bf16 %v243
    %v520 = vunpack.c.h.s8.bf16 %v238
    %v521 = vunpack.c.h.s8.bf16 %v239
    %v522 = vunpack.c.h.s8.bf16 %v240
    %v523 = vunpack.c.h.s8.bf16 %v241
    %v524 = vunpack.c.h.s8.bf16 %v242
    %v525 = vunpack.c.h.s8.bf16 %v243
    %v526 = vunpack.c.l.s8.bf16 %v244
    %v527 = vunpack.c.l.s8.bf16 %v245
    %v528 = vunpack.c.l.s8.bf16 %v246
    %v529 = vunpack.c.l.s8.bf16 %v247
    %v530 = vunpack.c.l.s8.bf16 %v248
    %v531 = vunpack.c.l.s8.bf16 %v249
    %v532 = vunpack.c.h.s8.bf16 %v244
    %v533 = vunpack.c.h.s8.bf16 %v245
    %v534 = vunpack.c.h.s8.bf16 %v246
    %v535 = vunpack.c.h.s8.bf16 %v247
    %v536 = vunpack.c.h.s8.bf16 %v248
    %v537 = vunpack.c.h.s8.bf16 %v249
    %v544 = vunpack.c.l.b16 %v100
    %v545 = vunpack.c.h.b16 %v100
    %v546 = vunpack.c.l.b16 %v101
    %v547 = vunpack.c.h.b16 %v101
    %v548 = vunpack.c.l.b16 %v102
    %v549 = vunpack.c.h.b16 %v102
    %v550 = vunpack.c.l.b16 %v103
    %v551 = vunpack.c.h.b16 %v103
    %v552 = vunpack.c.l.b16 %v104
    %v553 = vunpack.c.h.b16 %v104
    %v554 = vunpack.c.l.b16 %v105
    %v555 = vunpack.c.h.b16 %v105
    %v556 = vpack.c.b16 %v550, %v544
    %v557 = vpack.c.b16 %v551, %v545
    %v558 = vpack.c.b16 %v552, %v546
    %v559 = vpack.c.b16 %v553, %v547
    %v560 = vpack.c.b16 %v554, %v548
    %v561 = vpack.c.b16 %v555, %v549
    %568 = vmatprep.subr.bf16.mxu0 %v251
    %569 = vmatpush1.bf16.msra.mxu0 %v250
    %570 = vmatprep.subr.bf16.mxu0 %v257
    %571 = vmatpush1.bf16.msra.mxu0 %v256
    %572 = vmatprep.subr.bf16.mxu0 %v263
    %573 = vmatpush1.bf16.msra.mxu0 %v262
    %574 = vmatprep.subr.bf16.mxu0 %v269
    %575 = vmatpush1.bf16.msra.mxu0 %v268
    %576 = vmatprep.subr.bf16.mxu0 %v275
    %577 = vmatpush1.bf16.msra.mxu0 %v274
    %578 = vmatprep.subr.bf16.mxu0 %v281
    %579 = vmatpush1.bf16.msra.mxu0 %v280
    %580 = vmatprep.subr.bf16.mxu0 %v287
    %581 = vmatpush1.bf16.msra.mxu0 %v286
    %582 = vmatprep.subr.bf16.mxu0 %v293
    %583 = vmatpush1.bf16.msra.mxu0 %v292
    %584 = vmatprep.subr.bf16.mxu0 %v299
    %585 = vmatpush1.bf16.msra.mxu0 %v298
    %586 = vmatprep.subr.bf16.mxu0 %v305
    %587 = vmatpush1.bf16.msra.mxu0 %v304
    %588 = vmatprep.subr.bf16.mxu0 %v311
    %589 = vmatpush1.bf16.msra.mxu0 %v310
    %590 = vmatprep.subr.bf16.mxu0 %v317
    %591 = vmatpush1.bf16.msra.mxu0 %v316
    %592 = vmatprep.subr.bf16.mxu0 %v323
    %593 = vmatpush1.bf16.msra.mxu0 %v322
    %594 = vmatprep.subr.bf16.mxu0 %v329
    %595 = vmatpush1.bf16.msra.mxu0 %v328
    %596 = vmatprep.subr.bf16.mxu0 %v335
    %597 = vmatpush1.bf16.msra.mxu0 %v334
    %598 = vmatprep.subr.bf16.mxu0 %v341
    %599 = vmatpush1.bf16.msra.mxu0 %v340
    %600 = vmatprep.mubr.bf16.mxu0 %v557
    %601 = vmatmul.mubr.bf16.gmra.mrb[0].mxu0 %v556
    %v602 = vpop.f32.mrb[0].mxu0
    %v603 = vadd.f32 0.0, %v602
    %v604 = vpop.f32.mrb[0].mxu0
    %v605 = vadd.f32 0.0, %v604
    %v606 = vpop.f32.mrb[0].mxu0
    %v607 = vadd.f32 0.0, %v606
    %v608 = vpop.f32.mrb[0].mxu0
    %v609 = vadd.f32 0.0, %v608
    %610 = vdwg.mxu0
    %611 = vmatprep.subr.bf16.mxu0 %v347
    %612 = vmatpush1.bf16.msra.mxu0 %v346
    %613 = vmatprep.subr.bf16.mxu0 %v353
    %614 = vmatpush1.bf16.msra.mxu0 %v352
    %615 = vmatprep.subr.bf16.mxu0 %v359
    %616 = vmatpush1.bf16.msra.mxu0 %v358
    %617 = vmatprep.subr.bf16.mxu0 %v365
    %618 = vmatpush1.bf16.msra.mxu0 %v364
    %619 = vmatprep.subr.bf16.mxu0 %v371
    %620 = vmatpush1.bf16.msra.mxu0 %v370
    %621 = vmatprep.subr.bf16.mxu0 %v377
    %622 = vmatpush1.bf16.msra.mxu0 %v376
    %623 = vmatprep.subr.bf16.mxu0 %v383
    %624 = vmatpush1.bf16.msra.mxu0 %v382
    %625 = vmatprep.subr.bf16.mxu0 %v389
    %626 = vmatpush1.bf16.msra.mxu0 %v388
    %627 = vmatprep.subr.bf16.mxu0 %v395
    %628 = vmatpush1.bf16.msra.mxu0 %v394
    %629 = vmatprep.subr.bf16.mxu0 %v401
    %630 = vmatpush1.bf16.msra.mxu0 %v400
    %631 = vmatprep.subr.bf16.mxu0 %v407
    %632 = vmatpush1.bf16.msra.mxu0 %v406
    %633 = vmatprep.subr.bf16.mxu0 %v413
    %634 = vmatpush1.bf16.msra.mxu0 %v412
    %635 = vmatprep.subr.bf16.mxu0 %v419
    %636 = vmatpush1.bf16.msra.mxu0 %v418
    %637 = vmatprep.subr.bf16.mxu0 %v425
    %638 = vmatpush1.bf16.msra.mxu0 %v424
    %639 = vmatprep.subr.bf16.mxu0 %v431
    %640 = vmatpush1.bf16.msra.mxu0 %v430
    %641 = vmatprep.subr.bf16.mxu0 %v437
    %642 = vmatpush1.bf16.msra.mxu0 %v436
    %643 = vmatprep.mubr.bf16.mxu0 %v559
    %644 = vmatmul.mubr.bf16.gmra.mrb[0].mxu0 %v558
    %v645 = vpop.f32.mrb[0].mxu0
    %v646 = vadd.f32 %v603, %v645
    %v647 = vpop.f32.mrb[0].mxu0
    %v648 = vadd.f32 %v605, %v647
    %v649 = vpop.f32.mrb[0].mxu0
    %v650 = vadd.f32 %v607, %v649
    %v651 = vpop.f32.mrb[0].mxu0
    %v652 = vadd.f32 %v609, %v651
    %653 = vdwg.mxu0
    %654 = vmatprep.subr.bf16.mxu0 %v443
    %655 = vmatpush1.bf16.msra.mxu0 %v442
    %656 = vmatprep.subr.bf16.mxu0 %v449
    %657 = vmatpush1.bf16.msra.mxu0 %v448
    %658 = vmatprep.subr.bf16.mxu0 %v455
    %659 = vmatpush1.bf16.msra.mxu0 %v454
    %660 = vmatprep.subr.bf16.mxu0 %v461
    %661 = vmatpush1.bf16.msra.mxu0 %v460
    %662 = vmatprep.subr.bf16.mxu0 %v467
    %663 = vmatpush1.bf16.msra.mxu0 %v466
    %664 = vmatprep.subr.bf16.mxu0 %v473
    %665 = vmatpush1.bf16.msra.mxu0 %v472
    %666 = vmatprep.subr.bf16.mxu0 %v479
    %667 = vmatpush1.bf16.msra.mxu0 %v478
    %668 = vmatprep.subr.bf16.mxu0 %v485
    %669 = vmatpush1.bf16.msra.mxu0 %v484
    %670 = vmatprep.subr.bf16.mxu0 %v491
    %671 = vmatpush1.bf16.msra.mxu0 %v490
    %672 = vmatprep.subr.bf16.mxu0 %v497
    %673 = vmatpush1.bf16.msra.mxu0 %v496
    %674 = vmatprep.subr.bf16.mxu0 %v503
    %675 = vmatpush1.bf16.msra.mxu0 %v502
    %676 = vmatprep.subr.bf16.mxu0 %v509
    %677 = vmatpush1.bf16.msra.mxu0 %v508
    %678 = vmatprep.subr.bf16.mxu0 %v515
    %679 = vmatpush1.bf16.msra.mxu0 %v514
    %680 = vmatprep.subr.bf16.mxu0 %v521
    %681 = vmatpush1.bf16.msra.mxu0 %v520
    %682 = vmatprep.subr.bf16.mxu0 %v527
    %683 = vmatpush1.bf16.msra.mxu0 %v526
    %684 = vmatprep.subr.bf16.mxu0 %v533
    %685 = vmatpush1.bf16.msra.mxu0 %v532
    %686 = vmatprep.mubr.bf16.mxu0 %v561
    %687 = vmatmul.mubr.bf16.gmra.mrb[0].mxu0 %v560
    %v688 = vpop.f32.mrb[0].mxu0
    %v689 = vadd.f32 %v646, %v688
    %v690 = vpop.f32.mrb[0].mxu0
    %v691 = vadd.f32 %v648, %v690
    %v692 = vpop.f32.mrb[0].mxu0
    %v693 = vadd.f32 %v650, %v692
    %v694 = vpop.f32.mrb[0].mxu0
    %v695 = vadd.f32 %v652, %v694
    %696 = vdwg.mxu0
    %697 = vmatprep.subr.bf16.mxu0 %v253
    %698 = vmatpush1.bf16.msra.mxu0 %v252
    %699 = vmatprep.subr.bf16.mxu0 %v259
    %700 = vmatpush1.bf16.msra.mxu0 %v258
    %701 = vmatprep.subr.bf16.mxu0 %v265
    %702 = vmatpush1.bf16.msra.mxu0 %v264
    %703 = vmatprep.subr.bf16.mxu0 %v271
    %704 = vmatpush1.bf16.msra.mxu0 %v270
    %705 = vmatprep.subr.bf16.mxu0 %v277
    %706 = vmatpush1.bf16.msra.mxu0 %v276
    %707 = vmatprep.subr.bf16.mxu0 %v283
    %708 = vmatpush1.bf16.msra.mxu0 %v282
    %709 = vmatprep.subr.bf16.mxu0 %v289
    %710 = vmatpush1.bf16.msra.mxu0 %v288
    %711 = vmatprep.subr.bf16.mxu0 %v295
    %712 = vmatpush1.bf16.msra.mxu0 %v294
    %713 = vmatprep.subr.bf16.mxu0 %v301
    %714 = vmatpush1.bf16.msra.mxu0 %v300
    %715 = vmatprep.subr.bf16.mxu0 %v307
    %716 = vmatpush1.bf16.msra.mxu0 %v306
    %717 = vmatprep.subr.bf16.mxu0 %v313
    %718 = vmatpush1.bf16.msra.mxu0 %v312
    %719 = vmatprep.subr.bf16.mxu0 %v319
    %720 = vmatpush1.bf16.msra.mxu0 %v318
    %721 = vmatprep.subr.bf16.mxu0 %v325
    %722 = vmatpush1.bf16.msra.mxu0 %v324
    %723 = vmatprep.subr.bf16.mxu0 %v331
    %724 = vmatpush1.bf16.msra.mxu0 %v330
    %725 = vmatprep.subr.bf16.mxu0 %v337
    %726 = vmatpush1.bf16.msra.mxu0 %v336
    %727 = vmatprep.subr.bf16.mxu0 %v343
    %728 = vmatpush1.bf16.msra.mxu0 %v342
    %729 = vmatprep.mubr.bf16.mxu0 %v557
    %730 = vmatmul.mubr.bf16.gmra.mrb[0].mxu0 %v556
    %v731 = vpop.f32.mrb[0].mxu0
    %v732 = vadd.f32 0.0, %v731
    %v733 = vpop.f32.mrb[0].mxu0
    %v734 = vadd.f32 0.0, %v733
    %v735 = vpop.f32.mrb[0].mxu0
    %v736 = vadd.f32 0.0, %v735
    %v737 = vpop.f32.mrb[0].mxu0
    %v738 = vadd.f32 0.0, %v737
    %739 = vdwg.mxu0
    %740 = vmatprep.subr.bf16.mxu0 %v349
    %741 = vmatpush1.bf16.msra.mxu0 %v348
    %742 = vmatprep.subr.bf16.mxu0 %v355
    %743 = vmatpush1.bf16.msra.mxu0 %v354
    %744 = vmatprep.subr.bf16.mxu0 %v361
    %745 = vmatpush1.bf16.msra.mxu0 %v360
    %746 = vmatprep.subr.bf16.mxu0 %v367
    %747 = vmatpush1.bf16.msra.mxu0 %v366
    %748 = vmatprep.subr.bf16.mxu0 %v373
    %749 = vmatpush1.bf16.msra.mxu0 %v372
    %750 = vmatprep.subr.bf16.mxu0 %v379
    %751 = vmatpush1.bf16.msra.mxu0 %v378
    %752 = vmatprep.subr.bf16.mxu0 %v385
    %753 = vmatpush1.bf16.msra.mxu0 %v384
    %754 = vmatprep.subr.bf16.mxu0 %v391
    %755 = vmatpush1.bf16.msra.mxu0 %v390
    %756 = vmatprep.subr.bf16.mxu0 %v397
    %757 = vmatpush1.bf16.msra.mxu0 %v396
    %758 = vmatprep.subr.bf16.mxu0 %v403
    %759 = vmatpush1.bf16.msra.mxu0 %v402
    %760 = vmatprep.subr.bf16.mxu0 %v409
    %761 = vmatpush1.bf16.msra.mxu0 %v408
    %762 = vmatprep.subr.bf16.mxu0 %v415
    %763 = vmatpush1.bf16.msra.mxu0 %v414
    %764 = vmatprep.subr.bf16.mxu0 %v421
    %765 = vmatpush1.bf16.msra.mxu0 %v420
    %766 = vmatprep.subr.bf16.mxu0 %v427
    %767 = vmatpush1.bf16.msra.mxu0 %v426
    %768 = vmatprep.subr.bf16.mxu0 %v433
    %769 = vmatpush1.bf16.msra.mxu0 %v432
    %770 = vmatprep.subr.bf16.mxu0 %v439
    %771 = vmatpush1.bf16.msra.mxu0 %v438
    %772 = vmatprep.mubr.bf16.mxu0 %v559
    %773 = vmatmul.mubr.bf16.gmra.mrb[0].mxu0 %v558
    %v774 = vpop.f32.mrb[0].mxu0
    %v775 = vadd.f32 %v732, %v774
    %v776 = vpop.f32.mrb[0].mxu0
    %v777 = vadd.f32 %v734, %v776
    %v778 = vpop.f32.mrb[0].mxu0
    %v779 = vadd.f32 %v736, %v778
    %v780 = vpop.f32.mrb[0].mxu0
    %v781 = vadd.f32 %v738, %v780
    %782 = vdwg.mxu0
    %783 = vmatprep.subr.bf16.mxu0 %v445
    %784 = vmatpush1.bf16.msra.mxu0 %v444
    %785 = vmatprep.subr.bf16.mxu0 %v451
    %786 = vmatpush1.bf16.msra.mxu0 %v450
    %787 = vmatprep.subr.bf16.mxu0 %v457
    %788 = vmatpush1.bf16.msra.mxu0 %v456
    %789 = vmatprep.subr.bf16.mxu0 %v463
    %790 = vmatpush1.bf16.msra.mxu0 %v462
    %791 = vmatprep.subr.bf16.mxu0 %v469
    %792 = vmatpush1.bf16.msra.mxu0 %v468
    %793 = vmatprep.subr.bf16.mxu0 %v475
    %794 = vmatpush1.bf16.msra.mxu0 %v474
    %795 = vmatprep.subr.bf16.mxu0 %v481
    %796 = vmatpush1.bf16.msra.mxu0 %v480
    %797 = vmatprep.subr.bf16.mxu0 %v487
    %798 = vmatpush1.bf16.msra.mxu0 %v486
    %799 = vmatprep.subr.bf16.mxu0 %v493
    %800 = vmatpush1.bf16.msra.mxu0 %v492
    %801 = vmatprep.subr.bf16.mxu0 %v499
    %802 = vmatpush1.bf16.msra.mxu0 %v498
    %803 = vmatprep.subr.bf16.mxu0 %v505
    %804 = vmatpush1.bf16.msra.mxu0 %v504
    %805 = vmatprep.subr.bf16.mxu0 %v511
    %806 = vmatpush1.bf16.msra.mxu0 %v510
    %807 = vmatprep.subr.bf16.mxu0 %v517
    %808 = vmatpush1.bf16.msra.mxu0 %v516
    %809 = vmatprep.subr.bf16.mxu0 %v523
    %810 = vmatpush1.bf16.msra.mxu0 %v522
    %811 = vmatprep.subr.bf16.mxu0 %v529
    %812 = vmatpush1.bf16.msra.mxu0 %v528
    %813 = vmatprep.subr.bf16.mxu0 %v535
    %814 = vmatpush1.bf16.msra.mxu0 %v534
    %815 = vmatprep.mubr.bf16.mxu0 %v561
    %816 = vmatmul.mubr.bf16.gmra.mrb[0].mxu0 %v560
    %v817 = vpop.f32.mrb[0].mxu0
    %v818 = vadd.f32 %v775, %v817
    %v819 = vpop.f32.mrb[0].mxu0
    %v820 = vadd.f32 %v777, %v819
    %v821 = vpop.f32.mrb[0].mxu0
    %v822 = vadd.f32 %v779, %v821
    %v823 = vpop.f32.mrb[0].mxu0
    %v824 = vadd.f32 %v781, %v823
    %825 = vdwg.mxu0
    %826 = vmatprep.subr.bf16.mxu0 %v255
    %827 = vmatpush1.bf16.msra.mxu0 %v254
    %828 = vmatprep.subr.bf16.mxu0 %v261
    %829 = vmatpush1.bf16.msra.mxu0 %v260
    %830 = vmatprep.subr.bf16.mxu0 %v267
    %831 = vmatpush1.bf16.msra.mxu0 %v266
    %832 = vmatprep.subr.bf16.mxu0 %v273
    %833 = vmatpush1.bf16.msra.mxu0 %v272
    %834 = vmatprep.subr.bf16.mxu0 %v279
    %835 = vmatpush1.bf16.msra.mxu0 %v278
    %836 = vmatprep.subr.bf16.mxu0 %v285
    %837 = vmatpush1.bf16.msra.mxu0 %v284
    %838 = vmatprep.subr.bf16.mxu0 %v291
    %839 = vmatpush1.bf16.msra.mxu0 %v290
    %840 = vmatprep.subr.bf16.mxu0 %v297
    %841 = vmatpush1.bf16.msra.mxu0 %v296
    %842 = vmatprep.subr.bf16.mxu0 %v303
    %843 = vmatpush1.bf16.msra.mxu0 %v302
    %844 = vmatprep.subr.bf16.mxu0 %v309
    %845 = vmatpush1.bf16.msra.mxu0 %v308
    %846 = vmatprep.subr.bf16.mxu0 %v315
    %847 = vmatpush1.bf16.msra.mxu0 %v314
    %848 = vmatprep.subr.bf16.mxu0 %v321
    %849 = vmatpush1.bf16.msra.mxu0 %v320
    %850 = vmatprep.subr.bf16.mxu0 %v327
    %851 = vmatpush1.bf16.msra.mxu0 %v326
    %852 = vmatprep.subr.bf16.mxu0 %v333
    %853 = vmatpush1.bf16.msra.mxu0 %v332
    %854 = vmatprep.subr.bf16.mxu0 %v339
    %855 = vmatpush1.bf16.msra.mxu0 %v338
    %856 = vmatprep.subr.bf16.mxu0 %v345
    %857 = vmatpush1.bf16.msra.mxu0 %v344
    %858 = vmatprep.mubr.bf16.mxu0 %v557
    %859 = vmatmul.mubr.bf16.gmra.mrb[0].mxu0 %v556
    %v860 = vpop.f32.mrb[0].mxu0
    %v861 = vadd.f32 0.0, %v860
    %v862 = vpop.f32.mrb[0].mxu0
    %v863 = vadd.f32 0.0, %v862
    %v864 = vpop.f32.mrb[0].mxu0
    %v865 = vadd.f32 0.0, %v864
    %v866 = vpop.f32.mrb[0].mxu0
    %v867 = vadd.f32 0.0, %v866
    %868 = vdwg.mxu0
    %869 = vmatprep.subr.bf16.mxu0 %v351
    %870 = vmatpush1.bf16.msra.mxu0 %v350
    %871 = vmatprep.subr.bf16.mxu0 %v357
    %872 = vmatpush1.bf16.msra.mxu0 %v356
    %873 = vmatprep.subr.bf16.mxu0 %v363
    %874 = vmatpush1.bf16.msra.mxu0 %v362
    %875 = vmatprep.subr.bf16.mxu0 %v369
    %876 = vmatpush1.bf16.msra.mxu0 %v368
    %877 = vmatprep.subr.bf16.mxu0 %v375
    %878 = vmatpush1.bf16.msra.mxu0 %v374
    %879 = vmatprep.subr.bf16.mxu0 %v381
    %880 = vmatpush1.bf16.msra.mxu0 %v380
    %881 = vmatprep.subr.bf16.mxu0 %v387
    %882 = vmatpush1.bf16.msra.mxu0 %v386
    %883 = vmatprep.subr.bf16.mxu0 %v393
    %884 = vmatpush1.bf16.msra.mxu0 %v392
    %885 = vmatprep.subr.bf16.mxu0 %v399
    %886 = vmatpush1.bf16.msra.mxu0 %v398
    %887 = vmatprep.subr.bf16.mxu0 %v405
    %888 = vmatpush1.bf16.msra.mxu0 %v404
    %889 = vmatprep.subr.bf16.mxu0 %v411
    %890 = vmatpush1.bf16.msra.mxu0 %v410
    %891 = vmatprep.subr.bf16.mxu0 %v417
    %892 = vmatpush1.bf16.msra.mxu0 %v416
    %893 = vmatprep.subr.bf16.mxu0 %v423
    %894 = vmatpush1.bf16.msra.mxu0 %v422
    %895 = vmatprep.subr.bf16.mxu0 %v429
    %896 = vmatpush1.bf16.msra.mxu0 %v428
    %897 = vmatprep.subr.bf16.mxu0 %v435
    %898 = vmatpush1.bf16.msra.mxu0 %v434
    %899 = vmatprep.subr.bf16.mxu0 %v441
    %900 = vmatpush1.bf16.msra.mxu0 %v440
    %901 = vmatprep.mubr.bf16.mxu0 %v559
    %902 = vmatmul.mubr.bf16.gmra.mrb[0].mxu0 %v558
    %v903 = vpop.f32.mrb[0].mxu0
    %v904 = vadd.f32 %v861, %v903
    %v905 = vpop.f32.mrb[0].mxu0
    %v906 = vadd.f32 %v863, %v905
    %v907 = vpop.f32.mrb[0].mxu0
    %v908 = vadd.f32 %v865, %v907
    %v909 = vpop.f32.mrb[0].mxu0
    %v910 = vadd.f32 %v867, %v909
    %911 = vdwg.mxu0
    %912 = vmatprep.subr.bf16.mxu0 %v447
    %913 = vmatpush1.bf16.msra.mxu0 %v446
    %914 = vmatprep.subr.bf16.mxu0 %v453
    %915 = vmatpush1.bf16.msra.mxu0 %v452
    %916 = vmatprep.subr.bf16.mxu0 %v459
    %917 = vmatpush1.bf16.msra.mxu0 %v458
    %918 = vmatprep.subr.bf16.mxu0 %v465
    %919 = vmatpush1.bf16.msra.mxu0 %v464
    %920 = vmatprep.subr.bf16.mxu0 %v471
    %921 = vmatpush1.bf16.msra.mxu0 %v470
    %922 = vmatprep.subr.bf16.mxu0 %v477
    %923 = vmatpush1.bf16.msra.mxu0 %v476
    %924 = vmatprep.subr.bf16.mxu0 %v483
    %925 = vmatpush1.bf16.msra.mxu0 %v482
    %926 = vmatprep.subr.bf16.mxu0 %v489
    %927 = vmatpush1.bf16.msra.mxu0 %v488
    %928 = vmatprep.subr.bf16.mxu0 %v495
    %929 = vmatpush1.bf16.msra.mxu0 %v494
    %930 = vmatprep.subr.bf16.mxu0 %v501
    %931 = vmatpush1.bf16.msra.mxu0 %v500
    %932 = vmatprep.subr.bf16.mxu0 %v507
    %933 = vmatpush1.bf16.msra.mxu0 %v506
    %934 = vmatprep.subr.bf16.mxu0 %v513
    %935 = vmatpush1.bf16.msra.mxu0 %v512
    %936 = vmatprep.subr.bf16.mxu0 %v519
    %937 = vmatpush1.bf16.msra.mxu0 %v518
    %938 = vmatprep.subr.bf16.mxu0 %v525
    %939 = vmatpush1.bf16.msra.mxu0 %v524
    %940 = vmatprep.subr.bf16.mxu0 %v531
    %941 = vmatpush1.bf16.msra.mxu0 %v530
    %942 = vmatprep.subr.bf16.mxu0 %v537
    %943 = vmatpush1.bf16.msra.mxu0 %v536
    %944 = vmatprep.mubr.bf16.mxu0 %v561
    %945 = vmatmul.mubr.bf16.gmra.mrb[0].mxu0 %v560
    %v946 = vpop.f32.mrb[0].mxu0
    %v947 = vadd.f32 %v904, %v946
    %v948 = vpop.f32.mrb[0].mxu0
    %v949 = vadd.f32 %v906, %v948
    %v950 = vpop.f32.mrb[0].mxu0
    %v951 = vadd.f32 %v908, %v950
    %v952 = vpop.f32.mrb[0].mxu0
    %v953 = vadd.f32 %v910, %v952
    %954 = vdwg.mxu0
    %v955 = vld [vmem:[%s2] sm:$0x3f]
    %v957 = vlaneseq
    %v958 = vshrl.u32 %v957, 7
    %v959 = vsub.s32 0, %v958
    %v960 = vrot.slane %v955, %v959
    %v961 = vlaneseq
    %v962 = vshrl.u32 %v961, 7
    %v963 = vsub.s32 1, %v962
    %v964 = vrot.slane %v955, %v963
    %v965 = vlaneseq
    %v966 = vshrl.u32 %v965, 7
    %v967 = vsub.s32 2, %v966
    %v968 = vrot.slane %v955, %v967
    %v969 = vlaneseq
    %v970 = vshrl.u32 %v969, 7
    %v971 = vsub.s32 3, %v970
    %v972 = vrot.slane %v955, %v971
    %v973 = vlaneseq
    %v974 = vshrl.u32 %v973, 7
    %v975 = vsub.s32 4, %v974
    %v976 = vrot.slane %v955, %v975
    %v977 = vlaneseq
    %v978 = vshrl.u32 %v977, 7
    %v979 = vsub.s32 5, %v978
    %v980 = vrot.slane %v955, %v979
    %v987 = vmul.f32 %v689, %v960
    %v988 = vmul.f32 %v691, %v964
    %v989 = vmul.f32 %v818, %v968
    %v990 = vmul.f32 %v820, %v972
    %v991 = vmul.f32 %v947, %v976
    %v992 = vmul.f32 %v949, %v980
    %v993 = vmul.f32 %v693, %v960
    %v994 = vmul.f32 %v695, %v964
    %v995 = vmul.f32 %v822, %v968
    %v996 = vmul.f32 %v824, %v972
    %v997 = vmul.f32 %v951, %v976
    %v998 = vmul.f32 %v953, %v980
    %v999 = vld [vmem:[#allocation7] sm:$0x3f]
    %v1001 = vlaneseq
    %v1002 = vshrl.u32 %v1001, 7
    %v1003 = vsub.s32 0, %v1002
    %v1004 = vrot.slane %v999, %v1003
    %v1005 = vlaneseq
    %v1006 = vshrl.u32 %v1005, 7
    %v1007 = vsub.s32 1, %v1006
    %v1008 = vrot.slane %v999, %v1007
    %v1009 = vlaneseq
    %v1010 = vshrl.u32 %v1009, 7
    %v1011 = vsub.s32 2, %v1010
    %v1012 = vrot.slane %v999, %v1011
    %v1013 = vlaneseq
    %v1014 = vshrl.u32 %v1013, 7
    %v1015 = vsub.s32 3, %v1014
    %v1016 = vrot.slane %v999, %v1015
    %v1017 = vlaneseq
    %v1018 = vshrl.u32 %v1017, 7
    %v1019 = vsub.s32 4, %v1018
    %v1020 = vrot.slane %v999, %v1019
    %v1021 = vlaneseq
    %v1022 = vshrl.u32 %v1021, 7
    %v1023 = vsub.s32 5, %v1022
    %v1024 = vrot.slane %v999, %v1023
    %v1031 = vadd.f32 %v987, %v1004
    %v1032 = vadd.f32 %v988, %v1008
    %v1033 = vadd.f32 %v989, %v1012
    %v1034 = vadd.f32 %v990, %v1016
    %v1035 = vadd.f32 %v991, %v1020
    %v1036 = vadd.f32 %v992, %v1024
    %v1037 = vadd.f32 %v993, %v1004
    %v1038 = vadd.f32 %v994, %v1008
    %v1039 = vadd.f32 %v995, %v1012
    %v1040 = vadd.f32 %v996, %v1016
    %v1041 = vadd.f32 %v997, %v1020
    %v1042 = vadd.f32 %v998, %v1024
    %v1043 = vtanh.pop %v1031
    %v1044 = vtanh.pop %v1032
    %v1045 = vtanh.pop %v1033
    %v1046 = vtanh.pop %v1034
    %v1047 = vtanh.pop %v1035
    %v1048 = vtanh.pop %v1036
    %v1049 = vtanh.pop %v1037
    %v1050 = vtanh.pop %v1038
    %v1051 = vtanh.pop %v1039
    %v1052 = vtanh.pop %v1040
    %v1053 = vtanh.pop %v1041
    %v1054 = vtanh.pop %v1042
    %v1055 = vld [vmem:[#allocation8] sm:$0xff]
    %v1056 = vld [vmem:[#allocation8 + $0x8] sm:$0xff]
    %v1057 = vld [vmem:[#allocation8 + $0x10] sm:$0xff]
    %v1058 = vld [vmem:[#allocation8 + $0x18] sm:$0xff]
    %v1059 = vld [vmem:[#allocation8 + $0x20] sm:$0xff]
    %v1060 = vld [vmem:[#allocation8 + $0x28] sm:$0xff]
    %v1061 = vld [vmem:[#allocation8 + $0x30] sm:$0xff]
    %v1062 = vld [vmem:[#allocation8 + $0x38] sm:$0xff]
    %v1063 = vld [vmem:[#allocation8 + $0x40] sm:$0xff]
    %v1064 = vld [vmem:[#allocation8 + $0x48] sm:$0xff]
    %v1065 = vld [vmem:[#allocation8 + $0x50] sm:$0xff]
    %v1066 = vld [vmem:[#allocation8 + $0x58] sm:$0xff]
    %v1067 = vld [vmem:[#allocation8 + $0x60] sm:$0xff]
    %v1068 = vld [vmem:[#allocation8 + $0x68] sm:$0xff]
    %v1069 = vld [vmem:[#allocation8 + $0x70] sm:$0xff]
    %v1070 = vld [vmem:[#allocation8 + $0x78] sm:$0xff]
    %v1071 = vld [vmem:[#allocation8 + $0x80] sm:$0xff]
    %v1072 = vld [vmem:[#allocation8 + $0x88] sm:$0xff]
    %v1073 = vld [vmem:[#allocation8 + $0x90] sm:$0xff]
    %v1074 = vld [vmem:[#allocation8 + $0x98] sm:$0xff]
    %v1075 = vld [vmem:[#allocation8 + $0xa0] sm:$0xff]
    %v1076 = vld [vmem:[#allocation8 + $0xa8] sm:$0xff]
    %v1077 = vld [vmem:[#allocation8 + $0xb0] sm:$0xff]
    %v1078 = vld [vmem:[#allocation8 + $0xb8] sm:$0xff]
    %v1079 = vunpack.c.l.s8.bf16 %v1055
    %v1080 = vunpack.c.h.s8.bf16 %v1055
    %v1081 = vunpack.c.l.s8.bf16 %v1056
    %v1082 = vunpack.c.h.s8.bf16 %v1056
    %v1083 = vunpack.c.l.s8.bf16 %v1057
    %v1084 = vunpack.c.h.s8.bf16 %v1057
    %v1085 = vunpack.c.l.s8.bf16 %v1058
    %v1086 = vunpack.c.h.s8.bf16 %v1058
    %v1087 = vunpack.c.l.s8.bf16 %v1059
    %v1088 = vunpack.c.h.s8.bf16 %v1059
    %v1089 = vunpack.c.l.s8.bf16 %v1060
    %v1090 = vunpack.c.h.s8.bf16 %v1060
    %v1091 = vunpack.c.l.s8.bf16 %v1061
    %v1092 = vunpack.c.h.s8.bf16 %v1061
    %v1093 = vunpack.c.l.s8.bf16 %v1062
    %v1094 = vunpack.c.h.s8.bf16 %v1062
    %v1095 = vunpack.c.l.s8.bf16 %v1063
    %v1096 = vunpack.c.h.s8.bf16 %v1063
    %v1097 = vunpack.c.l.s8.bf16 %v1064
    %v1098 = vunpack.c.h.s8.bf16 %v1064
    %v1099 = vunpack.c.l.s8.bf16 %v1065
    %v1100 = vunpack.c.h.s8.bf16 %v1065
    %v1101 = vunpack.c.l.s8.bf16 %v1066
    %v1102 = vunpack.c.h.s8.bf16 %v1066
    %v1103 = vunpack.c.l.s8.bf16 %v1067
    %v1104 = vunpack.c.h.s8.bf16 %v1067
    %v1105 = vunpack.c.l.s8.bf16 %v1068
    %v1106 = vunpack.c.h.s8.bf16 %v1068
    %v1107 = vunpack.c.l.s8.bf16 %v1069
    %v1108 = vunpack.c.h.s8.bf16 %v1069
    %v1109 = vunpack.c.l.s8.bf16 %v1070
    %v1110 = vunpack.c.h.s8.bf16 %v1070
    %v1111 = vunpack.c.l.s8.bf16 %v1071
    %v1112 = vunpack.c.h.s8.bf16 %v1071
    %v1113 = vunpack.c.l.s8.bf16 %v1072
    %v1114 = vunpack.c.h.s8.bf16 %v1072
    %v1115 = vunpack.c.l.s8.bf16 %v1073
    %v1116 = vunpack.c.h.s8.bf16 %v1073
    %v1117 = vunpack.c.l.s8.bf16 %v1074
    %v1118 = vunpack.c.h.s8.bf16 %v1074
    %v1119 = vunpack.c.l.s8.bf16 %v1075
    %v1120 = vunpack.c.h.s8.bf16 %v1075
    %v1121 = vunpack.c.l.s8.bf16 %v1076
    %v1122 = vunpack.c.h.s8.bf16 %v1076
    %v1123 = vunpack.c.l.s8.bf16 %v1077
    %v1124 = vunpack.c.h.s8.bf16 %v1077
    %v1125 = vunpack.c.l.s8.bf16 %v1078
    %v1126 = vunpack.c.h.s8.bf16 %v1078
    %v1127 = vpack.c.bf16 %v1049, %v1043
    %v1128 = vpack.c.bf16 %v1050, %v1044
    %v1129 = vpack.c.bf16 %v1051, %v1045
    %v1130 = vpack.c.bf16 %v1052, %v1046
    %v1131 = vpack.c.bf16 %v1053, %v1047
    %v1132 = vpack.c.bf16 %v1054, %v1048
    %1133 = vmatprep.subr.bf16.mxu0 0
    %1134 = vmatpush1.bf16.msra.mxu0 %v1079
    %1135 = vmatprep.subr.bf16.mxu0 0
    %1136 = vmatpush1.bf16.msra.mxu0 %v1080
    %1137 = vmatprep.subr.bf16.mxu0 0
    %1138 = vmatpush1.bf16.msra.mxu0 %v1081
    %1139 = vmatprep.subr.bf16.mxu0 0
    %1140 = vmatpush1.bf16.msra.mxu0 %v1082
    %1141 = vmatprep.subr.bf16.mxu0 0
    %1142 = vmatpush1.bf16.msra.mxu0 %v1083
    %1143 = vmatprep.subr.bf16.mxu0 0
    %1144 = vmatpush1.bf16.msra.mxu0 %v1084
    %1145 = vmatprep.subr.bf16.mxu0 0
    %1146 = vmatpush1.bf16.msra.mxu0 %v1085
    %1147 = vmatprep.subr.bf16.mxu0 0
    %1148 = vmatpush1.bf16.msra.mxu0 %v1086
    %1149 = vmatprep.subr.bf16.mxu0 0
    %1150 = vmatpush1.bf16.msra.mxu0 %v1087
    %1151 = vmatprep.subr.bf16.mxu0 0
    %1152 = vmatpush1.bf16.msra.mxu0 %v1088
    %1153 = vmatprep.subr.bf16.mxu0 0
    %1154 = vmatpush1.bf16.msra.mxu0 %v1089
    %1155 = vmatprep.subr.bf16.mxu0 0
    %1156 = vmatpush1.bf16.msra.mxu0 %v1090
    %1157 = vmatprep.subr.bf16.mxu0 0
    %1158 = vmatpush1.bf16.msra.mxu0 %v1091
    %1159 = vmatprep.subr.bf16.mxu0 0
    %1160 = vmatpush1.bf16.msra.mxu0 %v1092
    %1161 = vmatprep.subr.bf16.mxu0 0
    %1162 = vmatpush1.bf16.msra.mxu0 %v1093
    %1163 = vmatprep.subr.bf16.mxu0 0
    %1164 = vmatpush1.bf16.msra.mxu0 %v1094
    %1165 = vmatprep.mubr.bf16.mxu0 %v1128
    %1166 = vmatmul.mubr.bf16.gmra.mrb[0].mxu0 %v1127
    %v1167 = vpop.f32.mrb[0].mxu0
    %v1168 = vadd.f32 0.0, %v1167
    %v1169 = vpop.f32.mrb[0].mxu0
    %v1170 = vpop.f32.mrb[0].mxu0
    %v1171 = vadd.f32 0.0, %v1170
    %v1172 = vpop.f32.mrb[0].mxu0
    %1173 = vdwg.mxu0
    %1174 = vmatprep.subr.bf16.mxu0 0
    %1175 = vmatpush1.bf16.msra.mxu0 %v1095
    %1176 = vmatprep.subr.bf16.mxu0 0
    %1177 = vmatpush1.bf16.msra.mxu0 %v1096
    %1178 = vmatprep.subr.bf16.mxu0 0
    %1179 = vmatpush1.bf16.msra.mxu0 %v1097
    %1180 = vmatprep.subr.bf16.mxu0 0
    %1181 = vmatpush1.bf16.msra.mxu0 %v1098
    %1182 = vmatprep.subr.bf16.mxu0 0
    %1183 = vmatpush1.bf16.msra.mxu0 %v1099
    %1184 = vmatprep.subr.bf16.mxu0 0
    %1185 = vmatpush1.bf16.msra.mxu0 %v1100
    %1186 = vmatprep.subr.bf16.mxu0 0
    %1187 = vmatpush1.bf16.msra.mxu0 %v1101
    %1188 = vmatprep.subr.bf16.mxu0 0
    %1189 = vmatpush1.bf16.msra.mxu0 %v1102
    %1190 = vmatprep.subr.bf16.mxu0 0
    %1191 = vmatpush1.bf16.msra.mxu0 %v1103
    %1192 = vmatprep.subr.bf16.mxu0 0
    %1193 = vmatpush1.bf16.msra.mxu0 %v1104
    %1194 = vmatprep.subr.bf16.mxu0 0
    %1195 = vmatpush1.bf16.msra.mxu0 %v1105
    %1196 = vmatprep.subr.bf16.mxu0 0
    %1197 = vmatpush1.bf16.msra.mxu0 %v1106
    %1198 = vmatprep.subr.bf16.mxu0 0
    %1199 = vmatpush1.bf16.msra.mxu0 %v1107
    %1200 = vmatprep.subr.bf16.mxu0 0
    %1201 = vmatpush1.bf16.msra.mxu0 %v1108
    %1202 = vmatprep.subr.bf16.mxu0 0
    %1203 = vmatpush1.bf16.msra.mxu0 %v1109
    %1204 = vmatprep.subr.bf16.mxu0 0
    %1205 = vmatpush1.bf16.msra.mxu0 %v1110
    %1206 = vmatprep.mubr.bf16.mxu0 %v1130
    %1207 = vmatmul.mubr.bf16.gmra.mrb[0].mxu0 %v1129
    %v1208 = vpop.f32.mrb[0].mxu0
    %v1209 = vadd.f32 %v1168, %v1208
    %v1210 = vpop.f32.mrb[0].mxu0
    %v1211 = vpop.f32.mrb[0].mxu0
    %v1212 = vadd.f32 %v1171, %v1211
    %v1213 = vpop.f32.mrb[0].mxu0
    %1214 = vdwg.mxu0
    %1215 = vmatprep.subr.bf16.mxu0 0
    %1216 = vmatpush1.bf16.msra.mxu0 %v1111
    %1217 = vmatprep.subr.bf16.mxu0 0
    %1218 = vmatpush1.bf16.msra.mxu0 %v1112
    %1219 = vmatprep.subr.bf16.mxu0 0
    %1220 = vmatpush1.bf16.msra.mxu0 %v1113
    %1221 = vmatprep.subr.bf16.mxu0 0
    %1222 = vmatpush1.bf16.msra.mxu0 %v1114
    %1223 = vmatprep.subr.bf16.mxu0 0
    %1224 = vmatpush1.bf16.msra.mxu0 %v1115
    %1225 = vmatprep.subr.bf16.mxu0 0
    %1226 = vmatpush1.bf16.msra.mxu0 %v1116
    %1227 = vmatprep.subr.bf16.mxu0 0
    %1228 = vmatpush1.bf16.msra.mxu0 %v1117
    %1229 = vmatprep.subr.bf16.mxu0 0
    %1230 = vmatpush1.bf16.msra.mxu0 %v1118
    %1231 = vmatprep.subr.bf16.mxu0 0
    %1232 = vmatpush1.bf16.msra.mxu0 %v1119
    %1233 = vmatprep.subr.bf16.mxu0 0
    %1234 = vmatpush1.bf16.msra.mxu0 %v1120
    %1235 = vmatprep.subr.bf16.mxu0 0
    %1236 = vmatpush1.bf16.msra.mxu0 %v1121
    %1237 = vmatprep.subr.bf16.mxu0 0
    %1238 = vmatpush1.bf16.msra.mxu0 %v1122
    %1239 = vmatprep.subr.bf16.mxu0 0
    %1240 = vmatpush1.bf16.msra.mxu0 %v1123
    %1241 = vmatprep.subr.bf16.mxu0 0
    %1242 = vmatpush1.bf16.msra.mxu0 %v1124
    %1243 = vmatprep.subr.bf16.mxu0 0
    %1244 = vmatpush1.bf16.msra.mxu0 %v1125
    %1245 = vmatprep.subr.bf16.mxu0 0
    %1246 = vmatpush1.bf16.msra.mxu0 %v1126
    %1247 = vmatprep.mubr.bf16.mxu0 %v1132
    %1248 = vmatmul.mubr.bf16.gmra.mrb[0].mxu0 %v1131
    %v1249 = vpop.f32.mrb[0].mxu0
    %v1250 = vadd.f32 %v1209, %v1249
    %v1251 = vpop.f32.mrb[0].mxu0
    %v1252 = vpop.f32.mrb[0].mxu0
    %v1253 = vadd.f32 %v1212, %v1252
    %v1254 = vpop.f32.mrb[0].mxu0
    %1255 = vdwg.mxu0
    %v1256 = vld [vmem:[%s5] sm:$0x1]
    %v1258 = vlaneseq
    %v1259 = vshrl.u32 %v1258, 7
    %v1260 = vsub.s32 0, %v1259
    %v1261 = vrot.slane %v1256, %v1260
    %v1263 = vmul.f32 %v1250, %v1261
    %v1264 = vmul.f32 %v1253, %v1261
    %v1265 = vld [vmem:[%s6] sm:$0x1]
    %v1267 = vlaneseq
    %v1268 = vshrl.u32 %v1267, 7
    %v1269 = vsub.s32 0, %v1268
    %v1270 = vrot.slane %v1265, %v1269
    %v1272 = vadd.f32 %v1263, %v1270
    %v1273 = vadd.f32 %v1264, %v1270
    %v1274 = vmul.f32 %v1272, 0.01
    %v1275 = vmul.f32 %v1273, 0.01
    %v1276 = vmax.f32 %v1272, %v1274
    %v1277 = vmax.f32 %v1273, %v1275
    %v1278 = vpack.c.bf16 %v1277, %v1276
    %v1279 = vld [vmem:[#allocation10] sm:$0xf]
    %v1280 = vld [vmem:[#allocation10 + $0x4] sm:$0xf]
    %v1281 = vld [vmem:[#allocation10 + $0x8] sm:$0xf]
    %v1282 = vld [vmem:[#allocation10 + $0xc] sm:$0xf]
    %v1283 = vld [vmem:[#allocation10 + $0x10] sm:$0xf]
    %v1284 = vld [vmem:[#allocation10 + $0x14] sm:$0xf]
    %v1285 = vld [vmem:[#allocation10 + $0x18] sm:$0xf]
    %v1286 = vld [vmem:[#allocation10 + $0x1c] sm:$0xf]
    %v1287 = vld [vmem:[#allocation10 + $0x20] sm:$0xf]
    %v1288 = vld [vmem:[#allocation10 + $0x24] sm:$0xf]
    %v1289 = vld [vmem:[#allocation10 + $0x28] sm:$0xf]
    %v1290 = vld [vmem:[#allocation10 + $0x2c] sm:$0xf]
    %v1291 = vld [vmem:[#allocation10 + $0x30] sm:$0xf]
    %v1292 = vld [vmem:[#allocation10 + $0x34] sm:$0xf]
    %v1293 = vld [vmem:[#allocation10 + $0x38] sm:$0xf]
    %v1294 = vld [vmem:[#allocation10 + $0x3c] sm:$0xf]
    %v1295 = vld [vmem:[%s8] sm:$0x1]
    %v1297 = vlaneseq
    %v1298 = vshrl.u32 %v1297, 7
    %v1299 = vsub.s32 0, %v1298
    %v1300 = vrot.slane %v1295, %v1299
    %v1318 = vunpack.c.l.b16 %v1279
    %v1319 = vunpack.c.l.b16 %v1280
    %v1320 = vunpack.c.l.b16 %v1281
    %v1321 = vunpack.c.l.b16 %v1282
    %v1322 = vunpack.c.l.b16 %v1283
    %v1323 = vunpack.c.l.b16 %v1284
    %v1324 = vunpack.c.l.b16 %v1285
    %v1325 = vunpack.c.l.b16 %v1286
    %v1326 = vunpack.c.l.b16 %v1287
    %v1327 = vunpack.c.l.b16 %v1288
    %v1328 = vunpack.c.l.b16 %v1289
    %v1329 = vunpack.c.l.b16 %v1290
    %v1330 = vunpack.c.l.b16 %v1291
    %v1331 = vunpack.c.l.b16 %v1292
    %v1332 = vunpack.c.l.b16 %v1293
    %v1333 = vunpack.c.l.b16 %v1294
    %v1334 = vpack.c.b16 %v1319, %v1318
    %v1335 = vpack.c.b16 %v1321, %v1320
    %v1336 = vpack.c.b16 %v1323, %v1322
    %v1337 = vpack.c.b16 %v1325, %v1324
    %v1338 = vpack.c.b16 %v1327, %v1326
    %v1339 = vpack.c.b16 %v1329, %v1328
    %v1340 = vpack.c.b16 %v1331, %v1330
    %v1341 = vpack.c.b16 %v1333, %v1332
    %1350 = vmatprep.subr.bf16.mxu0 0
    %1351 = vmatpush1.bf16.msra.mxu0 %v1334
    %1352 = vmatprep.subr.bf16.mxu0 0
    %1353 = vmatpush1.bf16.msra.mxu0 %v1335
    %1354 = vmatprep.subr.bf16.mxu0 0
    %1355 = vmatpush1.bf16.msra.mxu0 %v1336
    %1356 = vmatprep.subr.bf16.mxu0 0
    %1357 = vmatpush1.bf16.msra.mxu0 %v1337
    %1358 = vmatprep.subr.bf16.mxu0 0
    %1359 = vmatpush1.bf16.msra.mxu0 %v1338
    %1360 = vmatprep.subr.bf16.mxu0 0
    %1361 = vmatpush1.bf16.msra.mxu0 %v1339
    %1362 = vmatprep.subr.bf16.mxu0 0
    %1363 = vmatpush1.bf16.msra.mxu0 %v1340
    %1364 = vmatprep.subr.bf16.mxu0 0
    %1365 = vmatpush1.bf16.msra.mxu0 %v1341
    %1366 = vmatprep.subr.bf16.mxu0 0
    %1367 = vmatpush1.bf16.msra.mxu0 0
    %1368 = vmatprep.subr.bf16.mxu0 0
    %1369 = vmatpush1.bf16.msra.mxu0 0
    %1370 = vmatprep.subr.bf16.mxu0 0
    %1371 = vmatpush1.bf16.msra.mxu0 0
    %1372 = vmatprep.subr.bf16.mxu0 0
    %1373 = vmatpush1.bf16.msra.mxu0 0
    %1374 = vmatprep.subr.bf16.mxu0 0
    %1375 = vmatpush1.bf16.msra.mxu0 0
    %1376 = vmatprep.subr.bf16.mxu0 0
    %1377 = vmatpush1.bf16.msra.mxu0 0
    %1378 = vmatprep.subr.bf16.mxu0 0
    %1379 = vmatpush1.bf16.msra.mxu0 0
    %1380 = vmatprep.subr.bf16.mxu0 0
    %1381 = vmatpush1.bf16.msra.mxu0 0
    %1382 = vmatprep.mubr.bf16.mxu0 0
    %1383 = vmatmul.mubr.bf16.gmra.mrb[0].mxu0 %v1278
    %v1384 = vpop.f32.mrb[0].mxu0
    %v1385 = vadd.f32 %v1300, %v1384
    %v1386 = vpop.f32.mrb[0].mxu0
    %v1387 = vpop.f32.mrb[0].mxu0
    %v1388 = vadd.f32 %v1300, %v1387
    %v1389 = vpop.f32.mrb[0].mxu0
    %1390 = vdwg.mxu0
    %1391 = vst [vmem:[#allocation11] sm:$0xff] %v1385
    %1392 = vst [vmem:[#allocation11 + $0x8] sm:$0xff] %v1388
    // Predicated region
    $region58: #{tpu_custom_call.1} parent=1 // pred_check
      _
    $region59: #{tpu_custom_call.1} parent=1 // pred_check_branch
      %1394 = sbr.rel (0) target = $region61
    $region60: #{tpu_custom_call.1} parent=1 // pred_region
      %s1396 = ssub.s32 256, 256
      %1397 = vsyncadd [#allocation4], %s1396
      %s1398 = sshll.u32 [#allocation11], 4
      %s1399 = int_to_ptr.vmem [resolvable:$true] %s1398
      %1404 = dma.vmem_to_hbm [thread:$0]  %s1399, 256, %s9, [#allocation4], 128, 128, 8
    $region61: #{tpu_custom_call.1} parent=1 // pred_fallthru
      _
    // Predicated region
    $region62: #{tpu_custom_call.1} parent=1 // pred_check
      _
    $region63: #{tpu_custom_call.1} parent=1 // pred_check_branch
      %1406 = sbr.rel (0) target = $region65
    $region64: #{tpu_custom_call.1} parent=1 // pred_region
      %1407 = dma.done [#allocation4], 256
    $region65: #{tpu_custom_call.1} parent=1 // pred_fallthru
      _
    %1408 = vsyncpa [#allocation3], 1
    %1409 = vsyncpa [#allocation6], 1
    %1410 = vsyncpa [#allocation9], 1
    %1411 = vsyncpa [#allocation4], 1

</llo_original>
